<compile_context>
chip_gen: v7x
topology: tpu7x:2x2x1
jax: 0.10.0
libtpu: 0.0.40
codegen_flags: <defaults>
</compile_context>

<pallas_src>
import functools

import jax
import jax.numpy as jnp
from jax import lax
from jax.experimental import pallas as pl
from jax.experimental.pallas import tpu as pltpu


def _round_up(x, m):
    return ((x + m - 1) // m) * m


def dan_kernel(ids_ref, emb_ref, w1_ref, b1_ref, wc_ref, bc_ref,
               out_ref, gather_ref, acc_ref, *, seq_len):
    """One batch tile of the DAN forward.

    ids_ref    : SMEM [b_pad*seq_len] int32 (scalar-prefetched, 1-D flat);
                 dropped / padding slots point at the zero sentinel row.
    emb_ref    : VMEM [V_pad, E_pad] f32 embedding table (zero-padded).
    w1_ref     : VMEM [E_pad, H_pad] bf16 hidden weight (stored [in, out]).
    b1_ref     : VMEM [1, H_pad]     f32 hidden bias.
    wc_ref     : VMEM [H_pad, T_pad] bf16 classifier weight ([in, out]).
    bc_ref     : VMEM [1, T_pad]     f32 classifier bias.
    out_ref    : VMEM [block_b, T_pad] f32 scores for this batch tile.
    gather_ref : VMEM [block_b, E_pad] f32 scratch (rows for one position).
    acc_ref    : VMEM [block_b, E_pad] f32 pooled-sum accumulator.
    """
    bt = pl.program_id(0)
    block_b, _ = gather_ref.shape
    v_pad = emb_ref.shape[0]
    base = bt * (block_b * seq_len)

    # Embedding lookup + sum pooling.
    # For each sequence position l: gather block_b table rows into a dense
    # (block_b, E_pad) scratch tile, then do ONE full-width add into the
    # accumulator.  -> L full-vreg adds instead of B*L (1,E) partial adds.
    acc_ref[...] = jnp.zeros_like(acc_ref)
    for l in range(seq_len):                       # static: short sequence
        def gather_row(b, carry):
            idx = ids_ref[base + b * seq_len + l]  # scalar read from SMEM
            idx = jnp.clip(idx, 0, v_pad - 1)      # no HW bounds check on VMEM
            gather_ref[pl.ds(b, 1), :] = emb_ref[pl.ds(idx, 1), :]
            return carry
        lax.fori_loop(0, block_b, gather_row, 0, unroll=(block_b <= 16))
        acc_ref[...] += gather_ref[...]

    pooled = acc_ref[...]                          # [block_b, E_pad] f32

    # Hidden layer: Linear + ReLU (Dropout is identity in eval mode).
    h = jnp.dot(pooled.astype(jnp.bfloat16), w1_ref[...],
                preferred_element_type=jnp.float32) + b1_ref[...]
    h = jnp.maximum(h, 0.0)

    # Classifier (lane-dense padded output; wrapper slices back to tag_size).
    out_ref[...] = jnp.dot(h.astype(jnp.bfloat16), wc_ref[...],
                           preferred_element_type=jnp.float32) + bc_ref[...]


def prepare_dan_params(emb, w1_t, b1, wc_t, bc):
    """One-time padding / casting of parameters to a lane-dense, MXU-friendly
    layout.  Hoisted out of dan_forward so the padded copies (including the
    vocab table) are not re-materialized in HBM on every forward call.

    emb       : [V, E] f32 embedding table.
    w1_t, b1  : hidden Linear, weight pre-transposed to [E, H], bias [1, H].
    wc_t, bc  : classifier Linear, weight pre-transposed to [H, T], bias [1, T].
    """
    V, E = emb.shape
    H = w1_t.shape[1]
    T = wc_t.shape[1]
    e_pad = _round_up(E, 128)                      # 128 lanes is enough for any
    h_pad = _round_up(H, 128)                      # MXU generation; never pad
    t_pad = _round_up(T, 128)                      # beyond what's needed.
    v_pad = _round_up(V + 1, 8)                    # +1: zero sentinel row

    emb_p = jnp.zeros((v_pad, e_pad), jnp.float32).at[:V, :E].set(emb)
    w1_p = jnp.zeros((e_pad, h_pad), jnp.bfloat16).at[:E, :H].set(
        w1_t.astype(jnp.bfloat16))
    b1_p = jnp.zeros((1, h_pad), jnp.float32).at[:, :H].set(b1.reshape(1, H))
    wc_p = jnp.zeros((h_pad, t_pad), jnp.bfloat16).at[:H, :T].set(
        wc_t.astype(jnp.bfloat16))
    bc_p = jnp.zeros((1, t_pad), jnp.float32).at[:, :T].set(bc.reshape(1, T))

    dims = dict(V=V, E=E, H=H, T=T)
    return (emb_p, w1_p, b1_p, wc_p, bc_p), dims


def dan_forward(ids, keep_mask, params, dims, *, block_b=128):
    """DAN forward (eval mode, pooling_method='sum', hid_layer=2).

    ids       : [B, L] int32 token ids, all < |vocab|.
    keep_mask : [L] bool word-dropout keep mask (shared across the batch,
                matching the per-column Bernoulli in the PyTorch forward).
    params    : output of prepare_dan_params().
    Returns [B, T] f32 unnormalized scores.
    """
    emb_p, w1_p, b1_p, wc_p, bc_p = params
    B, L = ids.shape
    V, T = dims["V"], dims["T"]
    v_pad, e_pad = emb_p.shape
    h_pad = w1_p.shape[1]
    t_pad = wc_p.shape[1]

    # Batch tile: fill the MXU M dimension (up to 128 rows), but keep >= 2
    # grid steps when the batch allows so v7x's 2nd TensorCore is not idle.
    b_pad8 = _round_up(B, 8)
    blk = min(_round_up(block_b, 8), 128, b_pad8)
    if b_pad8 // blk < 2 and b_pad8 >= 16:
        blk = _round_up((b_pad8 + 1) // 2, 8)
    b_pad = _round_up(b_pad8, blk)

    # Fold word dropout + batch padding into the ids: dropped / padded slots
    # index the all-zero sentinel row V, contributing exactly 0 to the sum.
    ids_eff = jnp.where(keep_mask[None, :], ids, V).astype(jnp.int32)
    ids_eff = jnp.pad(ids_eff, ((0, b_pad - B), (0, 0)), constant_values=V)
    ids_flat = ids_eff.reshape(-1)    # 1-D SMEM: no [*,128] lane padding

    # VMEM limit sized from the actual footprint (+ headroom), instead of
    # relying on the default scoped limit.
    param_bytes = (emb_p.size * 4 + w1_p.size * 2 + b1_p.size * 4
                   + wc_p.size * 2 + bc_p.size * 4)
    tile_bytes = blk * (t_pad + 2 * e_pad) * 4     # out tile + 2 scratch tiles
    vmem_limit = int(min(2 * param_bytes + 4 * tile_bytes + (16 << 20),
                         128 << 20))

    grid = (b_pad // blk,)
    kernel = functools.partial(dan_kernel, seq_len=L)

    out = pl.pallas_call(
        kernel,
        out_shape=jax.ShapeDtypeStruct((b_pad, t_pad), jnp.float32),
        grid_spec=pltpu.PrefetchScalarGridSpec(
            num_scalar_prefetch=1,        # flat ids land in SMEM
            grid=grid,
            in_specs=[
                pl.BlockSpec((v_pad, e_pad), lambda i, ids_s: (0, 0)),
                pl.BlockSpec((e_pad, h_pad), lambda i, ids_s: (0, 0)),
                pl.BlockSpec((1, h_pad), lambda i, ids_s: (0, 0)),
                pl.BlockSpec((h_pad, t_pad), lambda i, ids_s: (0, 0)),
                pl.BlockSpec((1, t_pad), lambda i, ids_s: (0, 0)),
            ],
            out_specs=pl.BlockSpec((blk, t_pad), lambda i, ids_s: (i, 0)),
            scratch_shapes=[
                pltpu.VMEM((blk, e_pad), jnp.float32),   # gather tile
                pltpu.VMEM((blk, e_pad), jnp.float32),   # pooled accumulator
            ],
        ),
        compiler_params=pltpu.CompilerParams(
            dimension_semantics=("parallel",),   # batch tiles: 2 TCs on v7x
            vmem_limit_bytes=vmem_limit),
    )(ids_flat, emb_p, w1_p, b1_p, wc_p, bc_p)

    return out[:B, :T]


if __name__ == "__main__":
    # Hyperparameters (args): emb_size=32, hid_size=32, hid_layer=2,
    # word_drop=0.0, pooling_method='sum', emb_file=None, tag_size=8.
    B, L = 2, 8          # batch, seq_length
    V = 32               # |vocab|
    E, H, T = 32, 32, 8  # emb_size, hid_size, tag_size
    word_drop = 0.0

    key = jax.random.PRNGKey(0)
    k_ids, k_drop, k_emb, k_w1, k_b1, k_wc, k_bc = jax.random.split(key, 7)

    # Inputs.
    ids = jax.random.randint(k_ids, (B, L), 0, V, dtype=jnp.int32)
    keep_mask = jax.random.bernoulli(k_drop, 1.0 - word_drop, (L,))

    # Parameters: uniform(-0.08, 0.08), matching init_model_parameters().
    u = lambda k, shape: jax.random.uniform(
        k, shape, dtype=jnp.float32, minval=-0.08, maxval=0.08)
    emb = u(k_emb, (V, E))
    w1_t = u(k_w1, (E, H))   # Linear(E, H) weight, stored as [in, out]
    b1 = u(k_b1, (1, H))
    wc_t = u(k_wc, (H, T))   # Linear(H, T) weight, stored as [in, out]
    bc = u(k_bc, (1, T))

    # One-time parameter prep (padding / bf16 casts hoisted out of forward).
    params, dims = prepare_dan_params(emb, w1_t, b1, wc_t, bc)

    scores = dan_forward(ids, keep_mask, params, dims)
    scores = jax.block_until_ready(scores)

    # Pure-JAX reference using the same bf16-weight / f32-accumulation path.
    keep_f = keep_mask.astype(jnp.float32)
    pooled_ref = jnp.sum(emb[ids] * keep_f[None, :, None], axis=1)   # [B, E]
    h_ref = jnp.maximum(
        jnp.dot(pooled_ref.astype(jnp.bfloat16), w1_t.astype(jnp.bfloat16),
                preferred_element_type=jnp.float32) + b1, 0.0)
    ref = jnp.dot(h_ref.astype(jnp.bfloat16), wc_t.astype(jnp.bfloat16),
                  preferred_element_type=jnp.float32) + bc

    assert scores.shape == (B, T)
    assert jnp.allclose(scores, ref, atol=1e-3, rtol=1e-3), (
        float(jnp.max(jnp.abs(scores - ref))))

    print("KERNEL_OK")
</pallas_src>

<mosaic_0001>
module attributes {stable_mosaic.version = 11 : i64} {
  func.func @dan_kernel(%arg0: i32, %arg1: memref<64xi32, #tpu.memory_space<smem>>, %arg2: memref<40x128xf32, #tpu.memory_space<vmem>>, %arg3: memref<128x128xbf16, #tpu.memory_space<vmem>>, %arg4: memref<1x128xf32, #tpu.memory_space<vmem>>, %arg5: memref<128x128xbf16, #tpu.memory_space<vmem>>, %arg6: memref<1x128xf32, #tpu.memory_space<vmem>>, %arg7: memref<8x128xf32, #tpu.memory_space<vmem>>, %arg8: memref<8x128xf32, #tpu.memory_space<vmem>>, %arg9: memref<8x128xf32, #tpu.memory_space<vmem>>) attributes {dimension_semantics = [#tpu.dimension_semantics<parallel>], iteration_bounds = array<i64: 1>, scalar_prefetch = 1 : i64, scratch_operands = 2 : i64, tpu.core_type = #tpu.core_type<tc>, window_params = [{pipeline_mode = #tpu.pipeline_mode<synchronous>, transform_indices = @transform_0, window_bounds = array<i64: 40, 128>}, {pipeline_mode = #tpu.pipeline_mode<synchronous>, transform_indices = @transform_1, window_bounds = array<i64: 128, 128>}, {pipeline_mode = #tpu.pipeline_mode<synchronous>, transform_indices = @transform_2, window_bounds = array<i64: 1, 128>}, {pipeline_mode = #tpu.pipeline_mode<synchronous>, transform_indices = @transform_3, window_bounds = array<i64: 128, 128>}, {pipeline_mode = #tpu.pipeline_mode<synchronous>, transform_indices = @transform_4, window_bounds = array<i64: 1, 128>}, {transform_indices = @transform_5, window_bounds = array<i64: 8, 128>}]} {
    %c64_i32 = arith.constant 64 : i32
    %0 = arith.muli %arg0, %c64_i32 : i32
    %cst = arith.constant 0.000000e+00 : f32
    %1 = vector.broadcast %cst : f32 to vector<8x128xf32>
    %c0 = arith.constant 0 : index
    %c0_0 = arith.constant 0 : index
    %2 = vector.load %arg9[%c0, %c0_0] : memref<8x128xf32, #tpu.memory_space<vmem>>, vector<8x128xf32>
    tpu.vector_store %arg9[%c0, %c0_0], %1 {strides = array<i32>} : memref<8x128xf32, #tpu.memory_space<vmem>>, vector<8x128xf32>,
    %c0_i32 = arith.constant 0 : i32
    %c8_i32 = arith.constant 8 : i32
    %3 = arith.muli %c0_i32, %c8_i32 : i32
    %4 = arith.addi %0, %3 : i32
    %c0_i32_1 = arith.constant 0 : i32
    %5 = arith.addi %4, %c0_i32_1 : i32
    %6 = arith.index_cast %5 : i32 to index
    %7 = memref.load %arg1[%6] : memref<64xi32, #tpu.memory_space<smem>>
    %c0_i32_2 = arith.constant 0 : i32
    %c39_i32 = arith.constant 39 : i32
    %8 = arith.maxsi %c0_i32_2, %7 : i32
    %9 = arith.minsi %c39_i32, %8 : i32
    %10 = arith.index_cast %9 : i32 to index
    %c0_3 = arith.constant 0 : index
    %11 = vector.load %arg2[%10, %c0_3] : memref<40x128xf32, #tpu.memory_space<vmem>>, vector<1x128xf32>
    %12 = arith.index_cast %c0_i32 : i32 to index
    %c0_4 = arith.constant 0 : index
    %13 = vector.load %arg8[%12, %c0_4] : memref<8x128xf32, #tpu.memory_space<vmem>>, vector<1x128xf32>
    tpu.vector_store %arg8[%12, %c0_4], %11 {strides = array<i32>} : memref<8x128xf32, #tpu.memory_space<vmem>>, vector<1x128xf32>,
    %c1_i32 = arith.constant 1 : i32
    %c8_i32_5 = arith.constant 8 : i32
    %14 = arith.muli %c1_i32, %c8_i32_5 : i32
    %15 = arith.addi %0, %14 : i32
    %c0_i32_6 = arith.constant 0 : i32
    %16 = arith.addi %15, %c0_i32_6 : i32
    %17 = arith.index_cast %16 : i32 to index
    %18 = memref.load %arg1[%17] : memref<64xi32, #tpu.memory_space<smem>>
    %c0_i32_7 = arith.constant 0 : i32
    %c39_i32_8 = arith.constant 39 : i32
    %19 = arith.maxsi %c0_i32_7, %18 : i32
    %20 = arith.minsi %c39_i32_8, %19 : i32
    %21 = arith.index_cast %20 : i32 to index
    %c0_9 = arith.constant 0 : index
    %22 = vector.load %arg2[%21, %c0_9] : memref<40x128xf32, #tpu.memory_space<vmem>>, vector<1x128xf32>
    %23 = arith.index_cast %c1_i32 : i32 to index
    %c0_10 = arith.constant 0 : index
    %24 = vector.load %arg8[%23, %c0_10] : memref<8x128xf32, #tpu.memory_space<vmem>>, vector<1x128xf32>
    tpu.vector_store %arg8[%23, %c0_10], %22 {strides = array<i32>} : memref<8x128xf32, #tpu.memory_space<vmem>>, vector<1x128xf32>,
    %c2_i32 = arith.constant 2 : i32
    %c8_i32_11 = arith.constant 8 : i32
    %25 = arith.muli %c2_i32, %c8_i32_11 : i32
    %26 = arith.addi %0, %25 : i32
    %c0_i32_12 = arith.constant 0 : i32
    %27 = arith.addi %26, %c0_i32_12 : i32
    %28 = arith.index_cast %27 : i32 to index
    %29 = memref.load %arg1[%28] : memref<64xi32, #tpu.memory_space<smem>>
    %c0_i32_13 = arith.constant 0 : i32
    %c39_i32_14 = arith.constant 39 : i32
    %30 = arith.maxsi %c0_i32_13, %29 : i32
    %31 = arith.minsi %c39_i32_14, %30 : i32
    %32 = arith.index_cast %31 : i32 to index
    %c0_15 = arith.constant 0 : index
    %33 = vector.load %arg2[%32, %c0_15] : memref<40x128xf32, #tpu.memory_space<vmem>>, vector<1x128xf32>
    %34 = arith.index_cast %c2_i32 : i32 to index
    %c0_16 = arith.constant 0 : index
    %35 = vector.load %arg8[%34, %c0_16] : memref<8x128xf32, #tpu.memory_space<vmem>>, vector<1x128xf32>
    tpu.vector_store %arg8[%34, %c0_16], %33 {strides = array<i32>} : memref<8x128xf32, #tpu.memory_space<vmem>>, vector<1x128xf32>,
    %c3_i32 = arith.constant 3 : i32
    %c8_i32_17 = arith.constant 8 : i32
    %36 = arith.muli %c3_i32, %c8_i32_17 : i32
    %37 = arith.addi %0, %36 : i32
    %c0_i32_18 = arith.constant 0 : i32
    %38 = arith.addi %37, %c0_i32_18 : i32
    %39 = arith.index_cast %38 : i32 to index
    %40 = memref.load %arg1[%39] : memref<64xi32, #tpu.memory_space<smem>>
    %c0_i32_19 = arith.constant 0 : i32
    %c39_i32_20 = arith.constant 39 : i32
    %41 = arith.maxsi %c0_i32_19, %40 : i32
    %42 = arith.minsi %c39_i32_20, %41 : i32
    %43 = arith.index_cast %42 : i32 to index
    %c0_21 = arith.constant 0 : index
    %44 = vector.load %arg2[%43, %c0_21] : memref<40x128xf32, #tpu.memory_space<vmem>>, vector<1x128xf32>
    %45 = arith.index_cast %c3_i32 : i32 to index
    %c0_22 = arith.constant 0 : index
    %46 = vector.load %arg8[%45, %c0_22] : memref<8x128xf32, #tpu.memory_space<vmem>>, vector<1x128xf32>
    tpu.vector_store %arg8[%45, %c0_22], %44 {strides = array<i32>} : memref<8x128xf32, #tpu.memory_space<vmem>>, vector<1x128xf32>,
    %c4_i32 = arith.constant 4 : i32
    %c8_i32_23 = arith.constant 8 : i32
    %47 = arith.muli %c4_i32, %c8_i32_23 : i32
    %48 = arith.addi %0, %47 : i32
    %c0_i32_24 = arith.constant 0 : i32
    %49 = arith.addi %48, %c0_i32_24 : i32
    %50 = arith.index_cast %49 : i32 to index
    %51 = memref.load %arg1[%50] : memref<64xi32, #tpu.memory_space<smem>>
    %c0_i32_25 = arith.constant 0 : i32
    %c39_i32_26 = arith.constant 39 : i32
    %52 = arith.maxsi %c0_i32_25, %51 : i32
    %53 = arith.minsi %c39_i32_26, %52 : i32
    %54 = arith.index_cast %53 : i32 to index
    %c0_27 = arith.constant 0 : index
    %55 = vector.load %arg2[%54, %c0_27] : memref<40x128xf32, #tpu.memory_space<vmem>>, vector<1x128xf32>
    %56 = arith.index_cast %c4_i32 : i32 to index
    %c0_28 = arith.constant 0 : index
    %57 = vector.load %arg8[%56, %c0_28] : memref<8x128xf32, #tpu.memory_space<vmem>>, vector<1x128xf32>
    tpu.vector_store %arg8[%56, %c0_28], %55 {strides = array<i32>} : memref<8x128xf32, #tpu.memory_space<vmem>>, vector<1x128xf32>,
    %c5_i32 = arith.constant 5 : i32
    %c8_i32_29 = arith.constant 8 : i32
    %58 = arith.muli %c5_i32, %c8_i32_29 : i32
    %59 = arith.addi %0, %58 : i32
    %c0_i32_30 = arith.constant 0 : i32
    %60 = arith.addi %59, %c0_i32_30 : i32
    %61 = arith.index_cast %60 : i32 to index
    %62 = memref.load %arg1[%61] : memref<64xi32, #tpu.memory_space<smem>>
    %c0_i32_31 = arith.constant 0 : i32
    %c39_i32_32 = arith.constant 39 : i32
    %63 = arith.maxsi %c0_i32_31, %62 : i32
    %64 = arith.minsi %c39_i32_32, %63 : i32
    %65 = arith.index_cast %64 : i32 to index
    %c0_33 = arith.constant 0 : index
    %66 = vector.load %arg2[%65, %c0_33] : memref<40x128xf32, #tpu.memory_space<vmem>>, vector<1x128xf32>
    %67 = arith.index_cast %c5_i32 : i32 to index
    %c0_34 = arith.constant 0 : index
    %68 = vector.load %arg8[%67, %c0_34] : memref<8x128xf32, #tpu.memory_space<vmem>>, vector<1x128xf32>
    tpu.vector_store %arg8[%67, %c0_34], %66 {strides = array<i32>} : memref<8x128xf32, #tpu.memory_space<vmem>>, vector<1x128xf32>,
    %c6_i32 = arith.constant 6 : i32
    %c8_i32_35 = arith.constant 8 : i32
    %69 = arith.muli %c6_i32, %c8_i32_35 : i32
    %70 = arith.addi %0, %69 : i32
    %c0_i32_36 = arith.constant 0 : i32
    %71 = arith.addi %70, %c0_i32_36 : i32
    %72 = arith.index_cast %71 : i32 to index
    %73 = memref.load %arg1[%72] : memref<64xi32, #tpu.memory_space<smem>>
    %c0_i32_37 = arith.constant 0 : i32
    %c39_i32_38 = arith.constant 39 : i32
    %74 = arith.maxsi %c0_i32_37, %73 : i32
    %75 = arith.minsi %c39_i32_38, %74 : i32
    %76 = arith.index_cast %75 : i32 to index
    %c0_39 = arith.constant 0 : index
    %77 = vector.load %arg2[%76, %c0_39] : memref<40x128xf32, #tpu.memory_space<vmem>>, vector<1x128xf32>
    %78 = arith.index_cast %c6_i32 : i32 to index
    %c0_40 = arith.constant 0 : index
    %79 = vector.load %arg8[%78, %c0_40] : memref<8x128xf32, #tpu.memory_space<vmem>>, vector<1x128xf32>
    tpu.vector_store %arg8[%78, %c0_40], %77 {strides = array<i32>} : memref<8x128xf32, #tpu.memory_space<vmem>>, vector<1x128xf32>,
    %c7_i32 = arith.constant 7 : i32
    %c8_i32_41 = arith.constant 8 : i32
    %80 = arith.muli %c7_i32, %c8_i32_41 : i32
    %81 = arith.addi %0, %80 : i32
    %c0_i32_42 = arith.constant 0 : i32
    %82 = arith.addi %81, %c0_i32_42 : i32
    %83 = arith.index_cast %82 : i32 to index
    %84 = memref.load %arg1[%83] : memref<64xi32, #tpu.memory_space<smem>>
    %c0_i32_43 = arith.constant 0 : i32
    %c39_i32_44 = arith.constant 39 : i32
    %85 = arith.maxsi %c0_i32_43, %84 : i32
    %86 = arith.minsi %c39_i32_44, %85 : i32
    %87 = arith.index_cast %86 : i32 to index
    %c0_45 = arith.constant 0 : index
    %88 = vector.load %arg2[%87, %c0_45] : memref<40x128xf32, #tpu.memory_space<vmem>>, vector<1x128xf32>
    %89 = arith.index_cast %c7_i32 : i32 to index
    %c0_46 = arith.constant 0 : index
    %90 = vector.load %arg8[%89, %c0_46] : memref<8x128xf32, #tpu.memory_space<vmem>>, vector<1x128xf32>
    tpu.vector_store %arg8[%89, %c0_46], %88 {strides = array<i32>} : memref<8x128xf32, #tpu.memory_space<vmem>>, vector<1x128xf32>,
    %c8_i32_47 = arith.constant 8 : i32
    %c0_48 = arith.constant 0 : index
    %c0_49 = arith.constant 0 : index
    %91 = vector.load %arg9[%c0_48, %c0_49] : memref<8x128xf32, #tpu.memory_space<vmem>>, vector<8x128xf32>
    %c0_50 = arith.constant 0 : index
    %c0_51 = arith.constant 0 : index
    %92 = vector.load %arg8[%c0_50, %c0_51] : memref<8x128xf32, #tpu.memory_space<vmem>>, vector<8x128xf32>
    %93 = arith.addf %91, %92 : vector<8x128xf32>
    %c0_52 = arith.constant 0 : index
    %c0_53 = arith.constant 0 : index
    %94 = vector.load %arg9[%c0_52, %c0_53] : memref<8x128xf32, #tpu.memory_space<vmem>>, vector<8x128xf32>
    tpu.vector_store %arg9[%c0_52, %c0_53], %93 {strides = array<i32>} : memref<8x128xf32, #tpu.memory_space<vmem>>, vector<8x128xf32>,
    %c0_i32_54 = arith.constant 0 : i32
    %c8_i32_55 = arith.constant 8 : i32
    %95 = arith.muli %c0_i32_54, %c8_i32_55 : i32
    %96 = arith.addi %0, %95 : i32
    %c1_i32_56 = arith.constant 1 : i32
    %97 = arith.addi %96, %c1_i32_56 : i32
    %98 = arith.index_cast %97 : i32 to index
    %99 = memref.load %arg1[%98] : memref<64xi32, #tpu.memory_space<smem>>
    %c0_i32_57 = arith.constant 0 : i32
    %c39_i32_58 = arith.constant 39 : i32
    %100 = arith.maxsi %c0_i32_57, %99 : i32
    %101 = arith.minsi %c39_i32_58, %100 : i32
    %102 = arith.index_cast %101 : i32 to index
    %c0_59 = arith.constant 0 : index
    %103 = vector.load %arg2[%102, %c0_59] : memref<40x128xf32, #tpu.memory_space<vmem>>, vector<1x128xf32>
    %104 = arith.index_cast %c0_i32_54 : i32 to index
    %c0_60 = arith.constant 0 : index
    %105 = vector.load %arg8[%104, %c0_60] : memref<8x128xf32, #tpu.memory_space<vmem>>, vector<1x128xf32>
    tpu.vector_store %arg8[%104, %c0_60], %103 {strides = array<i32>} : memref<8x128xf32, #tpu.memory_space<vmem>>, vector<1x128xf32>,
    %c1_i32_61 = arith.constant 1 : i32
    %c8_i32_62 = arith.constant 8 : i32
    %106 = arith.muli %c1_i32_61, %c8_i32_62 : i32
    %107 = arith.addi %0, %106 : i32
    %c1_i32_63 = arith.constant 1 : i32
    %108 = arith.addi %107, %c1_i32_63 : i32
    %109 = arith.index_cast %108 : i32 to index
    %110 = memref.load %arg1[%109] : memref<64xi32, #tpu.memory_space<smem>>
    %c0_i32_64 = arith.constant 0 : i32
    %c39_i32_65 = arith.constant 39 : i32
    %111 = arith.maxsi %c0_i32_64, %110 : i32
    %112 = arith.minsi %c39_i32_65, %111 : i32
    %113 = arith.index_cast %112 : i32 to index
    %c0_66 = arith.constant 0 : index
    %114 = vector.load %arg2[%113, %c0_66] : memref<40x128xf32, #tpu.memory_space<vmem>>, vector<1x128xf32>
    %115 = arith.index_cast %c1_i32_61 : i32 to index
    %c0_67 = arith.constant 0 : index
    %116 = vector.load %arg8[%115, %c0_67] : memref<8x128xf32, #tpu.memory_space<vmem>>, vector<1x128xf32>
    tpu.vector_store %arg8[%115, %c0_67], %114 {strides = array<i32>} : memref<8x128xf32, #tpu.memory_space<vmem>>, vector<1x128xf32>,
    %c2_i32_68 = arith.constant 2 : i32
    %c8_i32_69 = arith.constant 8 : i32
    %117 = arith.muli %c2_i32_68, %c8_i32_69 : i32
    %118 = arith.addi %0, %117 : i32
    %c1_i32_70 = arith.constant 1 : i32
    %119 = arith.addi %118, %c1_i32_70 : i32
    %120 = arith.index_cast %119 : i32 to index
    %121 = memref.load %arg1[%120] : memref<64xi32, #tpu.memory_space<smem>>
    %c0_i32_71 = arith.constant 0 : i32
    %c39_i32_72 = arith.constant 39 : i32
    %122 = arith.maxsi %c0_i32_71, %121 : i32
    %123 = arith.minsi %c39_i32_72, %122 : i32
    %124 = arith.index_cast %123 : i32 to index
    %c0_73 = arith.constant 0 : index
    %125 = vector.load %arg2[%124, %c0_73] : memref<40x128xf32, #tpu.memory_space<vmem>>, vector<1x128xf32>
    %126 = arith.index_cast %c2_i32_68 : i32 to index
    %c0_74 = arith.constant 0 : index
    %127 = vector.load %arg8[%126, %c0_74] : memref<8x128xf32, #tpu.memory_space<vmem>>, vector<1x128xf32>
    tpu.vector_store %arg8[%126, %c0_74], %125 {strides = array<i32>} : memref<8x128xf32, #tpu.memory_space<vmem>>, vector<1x128xf32>,
    %c3_i32_75 = arith.constant 3 : i32
    %c8_i32_76 = arith.constant 8 : i32
    %128 = arith.muli %c3_i32_75, %c8_i32_76 : i32
    %129 = arith.addi %0, %128 : i32
    %c1_i32_77 = arith.constant 1 : i32
    %130 = arith.addi %129, %c1_i32_77 : i32
    %131 = arith.index_cast %130 : i32 to index
    %132 = memref.load %arg1[%131] : memref<64xi32, #tpu.memory_space<smem>>
    %c0_i32_78 = arith.constant 0 : i32
    %c39_i32_79 = arith.constant 39 : i32
    %133 = arith.maxsi %c0_i32_78, %132 : i32
    %134 = arith.minsi %c39_i32_79, %133 : i32
    %135 = arith.index_cast %134 : i32 to index
    %c0_80 = arith.constant 0 : index
    %136 = vector.load %arg2[%135, %c0_80] : memref<40x128xf32, #tpu.memory_space<vmem>>, vector<1x128xf32>
    %137 = arith.index_cast %c3_i32_75 : i32 to index
    %c0_81 = arith.constant 0 : index
    %138 = vector.load %arg8[%137, %c0_81] : memref<8x128xf32, #tpu.memory_space<vmem>>, vector<1x128xf32>
    tpu.vector_store %arg8[%137, %c0_81], %136 {strides = array<i32>} : memref<8x128xf32, #tpu.memory_space<vmem>>, vector<1x128xf32>,
    %c4_i32_82 = arith.constant 4 : i32
    %c8_i32_83 = arith.constant 8 : i32
    %139 = arith.muli %c4_i32_82, %c8_i32_83 : i32
    %140 = arith.addi %0, %139 : i32
    %c1_i32_84 = arith.constant 1 : i32
    %141 = arith.addi %140, %c1_i32_84 : i32
    %142 = arith.index_cast %141 : i32 to index
    %143 = memref.load %arg1[%142] : memref<64xi32, #tpu.memory_space<smem>>
    %c0_i32_85 = arith.constant 0 : i32
    %c39_i32_86 = arith.constant 39 : i32
    %144 = arith.maxsi %c0_i32_85, %143 : i32
    %145 = arith.minsi %c39_i32_86, %144 : i32
    %146 = arith.index_cast %145 : i32 to index
    %c0_87 = arith.constant 0 : index
    %147 = vector.load %arg2[%146, %c0_87] : memref<40x128xf32, #tpu.memory_space<vmem>>, vector<1x128xf32>
    %148 = arith.index_cast %c4_i32_82 : i32 to index
    %c0_88 = arith.constant 0 : index
    %149 = vector.load %arg8[%148, %c0_88] : memref<8x128xf32, #tpu.memory_space<vmem>>, vector<1x128xf32>
    tpu.vector_store %arg8[%148, %c0_88], %147 {strides = array<i32>} : memref<8x128xf32, #tpu.memory_space<vmem>>, vector<1x128xf32>,
    %c5_i32_89 = arith.constant 5 : i32
    %c8_i32_90 = arith.constant 8 : i32
    %150 = arith.muli %c5_i32_89, %c8_i32_90 : i32
    %151 = arith.addi %0, %150 : i32
    %c1_i32_91 = arith.constant 1 : i32
    %152 = arith.addi %151, %c1_i32_91 : i32
    %153 = arith.index_cast %152 : i32 to index
    %154 = memref.load %arg1[%153] : memref<64xi32, #tpu.memory_space<smem>>
    %c0_i32_92 = arith.constant 0 : i32
    %c39_i32_93 = arith.constant 39 : i32
    %155 = arith.maxsi %c0_i32_92, %154 : i32
    %156 = arith.minsi %c39_i32_93, %155 : i32
    %157 = arith.index_cast %156 : i32 to index
    %c0_94 = arith.constant 0 : index
    %158 = vector.load %arg2[%157, %c0_94] : memref<40x128xf32, #tpu.memory_space<vmem>>, vector<1x128xf32>
    %159 = arith.index_cast %c5_i32_89 : i32 to index
    %c0_95 = arith.constant 0 : index
    %160 = vector.load %arg8[%159, %c0_95] : memref<8x128xf32, #tpu.memory_space<vmem>>, vector<1x128xf32>
    tpu.vector_store %arg8[%159, %c0_95], %158 {strides = array<i32>} : memref<8x128xf32, #tpu.memory_space<vmem>>, vector<1x128xf32>,
    %c6_i32_96 = arith.constant 6 : i32
    %c8_i32_97 = arith.constant 8 : i32
    %161 = arith.muli %c6_i32_96, %c8_i32_97 : i32
    %162 = arith.addi %0, %161 : i32
    %c1_i32_98 = arith.constant 1 : i32
    %163 = arith.addi %162, %c1_i32_98 : i32
    %164 = arith.index_cast %163 : i32 to index
    %165 = memref.load %arg1[%164] : memref<64xi32, #tpu.memory_space<smem>>
    %c0_i32_99 = arith.constant 0 : i32
    %c39_i32_100 = arith.constant 39 : i32
    %166 = arith.maxsi %c0_i32_99, %165 : i32
    %167 = arith.minsi %c39_i32_100, %166 : i32
    %168 = arith.index_cast %167 : i32 to index
    %c0_101 = arith.constant 0 : index
    %169 = vector.load %arg2[%168, %c0_101] : memref<40x128xf32, #tpu.memory_space<vmem>>, vector<1x128xf32>
    %170 = arith.index_cast %c6_i32_96 : i32 to index
    %c0_102 = arith.constant 0 : index
    %171 = vector.load %arg8[%170, %c0_102] : memref<8x128xf32, #tpu.memory_space<vmem>>, vector<1x128xf32>
    tpu.vector_store %arg8[%170, %c0_102], %169 {strides = array<i32>} : memref<8x128xf32, #tpu.memory_space<vmem>>, vector<1x128xf32>,
    %c7_i32_103 = arith.constant 7 : i32
    %c8_i32_104 = arith.constant 8 : i32
    %172 = arith.muli %c7_i32_103, %c8_i32_104 : i32
    %173 = arith.addi %0, %172 : i32
    %c1_i32_105 = arith.constant 1 : i32
    %174 = arith.addi %173, %c1_i32_105 : i32
    %175 = arith.index_cast %174 : i32 to index
    %176 = memref.load %arg1[%175] : memref<64xi32, #tpu.memory_space<smem>>
    %c0_i32_106 = arith.constant 0 : i32
    %c39_i32_107 = arith.constant 39 : i32
    %177 = arith.maxsi %c0_i32_106, %176 : i32
    %178 = arith.minsi %c39_i32_107, %177 : i32
    %179 = arith.index_cast %178 : i32 to index
    %c0_108 = arith.constant 0 : index
    %180 = vector.load %arg2[%179, %c0_108] : memref<40x128xf32, #tpu.memory_space<vmem>>, vector<1x128xf32>
    %181 = arith.index_cast %c7_i32_103 : i32 to index
    %c0_109 = arith.constant 0 : index
    %182 = vector.load %arg8[%181, %c0_109] : memref<8x128xf32, #tpu.memory_space<vmem>>, vector<1x128xf32>
    tpu.vector_store %arg8[%181, %c0_109], %180 {strides = array<i32>} : memref<8x128xf32, #tpu.memory_space<vmem>>, vector<1x128xf32>,
    %c8_i32_110 = arith.constant 8 : i32
    %c0_111 = arith.constant 0 : index
    %c0_112 = arith.constant 0 : index
    %183 = vector.load %arg9[%c0_111, %c0_112] : memref<8x128xf32, #tpu.memory_space<vmem>>, vector<8x128xf32>
    %c0_113 = arith.constant 0 : index
    %c0_114 = arith.constant 0 : index
    %184 = vector.load %arg8[%c0_113, %c0_114] : memref<8x128xf32, #tpu.memory_space<vmem>>, vector<8x128xf32>
    %185 = arith.addf %183, %184 : vector<8x128xf32>
    %c0_115 = arith.constant 0 : index
    %c0_116 = arith.constant 0 : index
    %186 = vector.load %arg9[%c0_115, %c0_116] : memref<8x128xf32, #tpu.memory_space<vmem>>, vector<8x128xf32>
    tpu.vector_store %arg9[%c0_115, %c0_116], %185 {strides = array<i32>} : memref<8x128xf32, #tpu.memory_space<vmem>>, vector<8x128xf32>,
    %c0_i32_117 = arith.constant 0 : i32
    %c8_i32_118 = arith.constant 8 : i32
    %187 = arith.muli %c0_i32_117, %c8_i32_118 : i32
    %188 = arith.addi %0, %187 : i32
    %c2_i32_119 = arith.constant 2 : i32
    %189 = arith.addi %188, %c2_i32_119 : i32
    %190 = arith.index_cast %189 : i32 to index
    %191 = memref.load %arg1[%190] : memref<64xi32, #tpu.memory_space<smem>>
    %c0_i32_120 = arith.constant 0 : i32
    %c39_i32_121 = arith.constant 39 : i32
    %192 = arith.maxsi %c0_i32_120, %191 : i32
    %193 = arith.minsi %c39_i32_121, %192 : i32
    %194 = arith.index_cast %193 : i32 to index
    %c0_122 = arith.constant 0 : index
    %195 = vector.load %arg2[%194, %c0_122] : memref<40x128xf32, #tpu.memory_space<vmem>>, vector<1x128xf32>
    %196 = arith.index_cast %c0_i32_117 : i32 to index
    %c0_123 = arith.constant 0 : index
    %197 = vector.load %arg8[%196, %c0_123] : memref<8x128xf32, #tpu.memory_space<vmem>>, vector<1x128xf32>
    tpu.vector_store %arg8[%196, %c0_123], %195 {strides = array<i32>} : memref<8x128xf32, #tpu.memory_space<vmem>>, vector<1x128xf32>,
    %c1_i32_124 = arith.constant 1 : i32
    %c8_i32_125 = arith.constant 8 : i32
    %198 = arith.muli %c1_i32_124, %c8_i32_125 : i32
    %199 = arith.addi %0, %198 : i32
    %c2_i32_126 = arith.constant 2 : i32
    %200 = arith.addi %199, %c2_i32_126 : i32
    %201 = arith.index_cast %200 : i32 to index
    %202 = memref.load %arg1[%201] : memref<64xi32, #tpu.memory_space<smem>>
    %c0_i32_127 = arith.constant 0 : i32
    %c39_i32_128 = arith.constant 39 : i32
    %203 = arith.maxsi %c0_i32_127, %202 : i32
    %204 = arith.minsi %c39_i32_128, %203 : i32
    %205 = arith.index_cast %204 : i32 to index
    %c0_129 = arith.constant 0 : index
    %206 = vector.load %arg2[%205, %c0_129] : memref<40x128xf32, #tpu.memory_space<vmem>>, vector<1x128xf32>
    %207 = arith.index_cast %c1_i32_124 : i32 to index
    %c0_130 = arith.constant 0 : index
    %208 = vector.load %arg8[%207, %c0_130] : memref<8x128xf32, #tpu.memory_space<vmem>>, vector<1x128xf32>
    tpu.vector_store %arg8[%207, %c0_130], %206 {strides = array<i32>} : memref<8x128xf32, #tpu.memory_space<vmem>>, vector<1x128xf32>,
    %c2_i32_131 = arith.constant 2 : i32
    %c8_i32_132 = arith.constant 8 : i32
    %209 = arith.muli %c2_i32_131, %c8_i32_132 : i32
    %210 = arith.addi %0, %209 : i32
    %c2_i32_133 = arith.constant 2 : i32
    %211 = arith.addi %210, %c2_i32_133 : i32
    %212 = arith.index_cast %211 : i32 to index
    %213 = memref.load %arg1[%212] : memref<64xi32, #tpu.memory_space<smem>>
    %c0_i32_134 = arith.constant 0 : i32
    %c39_i32_135 = arith.constant 39 : i32
    %214 = arith.maxsi %c0_i32_134, %213 : i32
    %215 = arith.minsi %c39_i32_135, %214 : i32
    %216 = arith.index_cast %215 : i32 to index
    %c0_136 = arith.constant 0 : index
    %217 = vector.load %arg2[%216, %c0_136] : memref<40x128xf32, #tpu.memory_space<vmem>>, vector<1x128xf32>
    %218 = arith.index_cast %c2_i32_131 : i32 to index
    %c0_137 = arith.constant 0 : index
    %219 = vector.load %arg8[%218, %c0_137] : memref<8x128xf32, #tpu.memory_space<vmem>>, vector<1x128xf32>
    tpu.vector_store %arg8[%218, %c0_137], %217 {strides = array<i32>} : memref<8x128xf32, #tpu.memory_space<vmem>>, vector<1x128xf32>,
    %c3_i32_138 = arith.constant 3 : i32
    %c8_i32_139 = arith.constant 8 : i32
    %220 = arith.muli %c3_i32_138, %c8_i32_139 : i32
    %221 = arith.addi %0, %220 : i32
    %c2_i32_140 = arith.constant 2 : i32
    %222 = arith.addi %221, %c2_i32_140 : i32
    %223 = arith.index_cast %222 : i32 to index
    %224 = memref.load %arg1[%223] : memref<64xi32, #tpu.memory_space<smem>>
    %c0_i32_141 = arith.constant 0 : i32
    %c39_i32_142 = arith.constant 39 : i32
    %225 = arith.maxsi %c0_i32_141, %224 : i32
    %226 = arith.minsi %c39_i32_142, %225 : i32
    %227 = arith.index_cast %226 : i32 to index
    %c0_143 = arith.constant 0 : index
    %228 = vector.load %arg2[%227, %c0_143] : memref<40x128xf32, #tpu.memory_space<vmem>>, vector<1x128xf32>
    %229 = arith.index_cast %c3_i32_138 : i32 to index
    %c0_144 = arith.constant 0 : index
    %230 = vector.load %arg8[%229, %c0_144] : memref<8x128xf32, #tpu.memory_space<vmem>>, vector<1x128xf32>
    tpu.vector_store %arg8[%229, %c0_144], %228 {strides = array<i32>} : memref<8x128xf32, #tpu.memory_space<vmem>>, vector<1x128xf32>,
    %c4_i32_145 = arith.constant 4 : i32
    %c8_i32_146 = arith.constant 8 : i32
    %231 = arith.muli %c4_i32_145, %c8_i32_146 : i32
    %232 = arith.addi %0, %231 : i32
    %c2_i32_147 = arith.constant 2 : i32
    %233 = arith.addi %232, %c2_i32_147 : i32
    %234 = arith.index_cast %233 : i32 to index
    %235 = memref.load %arg1[%234] : memref<64xi32, #tpu.memory_space<smem>>
    %c0_i32_148 = arith.constant 0 : i32
    %c39_i32_149 = arith.constant 39 : i32
    %236 = arith.maxsi %c0_i32_148, %235 : i32
    %237 = arith.minsi %c39_i32_149, %236 : i32
    %238 = arith.index_cast %237 : i32 to index
    %c0_150 = arith.constant 0 : index
    %239 = vector.load %arg2[%238, %c0_150] : memref<40x128xf32, #tpu.memory_space<vmem>>, vector<1x128xf32>
    %240 = arith.index_cast %c4_i32_145 : i32 to index
    %c0_151 = arith.constant 0 : index
    %241 = vector.load %arg8[%240, %c0_151] : memref<8x128xf32, #tpu.memory_space<vmem>>, vector<1x128xf32>
    tpu.vector_store %arg8[%240, %c0_151], %239 {strides = array<i32>} : memref<8x128xf32, #tpu.memory_space<vmem>>, vector<1x128xf32>,
    %c5_i32_152 = arith.constant 5 : i32
    %c8_i32_153 = arith.constant 8 : i32
    %242 = arith.muli %c5_i32_152, %c8_i32_153 : i32
    %243 = arith.addi %0, %242 : i32
    %c2_i32_154 = arith.constant 2 : i32
    %244 = arith.addi %243, %c2_i32_154 : i32
    %245 = arith.index_cast %244 : i32 to index
    %246 = memref.load %arg1[%245] : memref<64xi32, #tpu.memory_space<smem>>
    %c0_i32_155 = arith.constant 0 : i32
    %c39_i32_156 = arith.constant 39 : i32
    %247 = arith.maxsi %c0_i32_155, %246 : i32
    %248 = arith.minsi %c39_i32_156, %247 : i32
    %249 = arith.index_cast %248 : i32 to index
    %c0_157 = arith.constant 0 : index
    %250 = vector.load %arg2[%249, %c0_157] : memref<40x128xf32, #tpu.memory_space<vmem>>, vector<1x128xf32>
    %251 = arith.index_cast %c5_i32_152 : i32 to index
    %c0_158 = arith.constant 0 : index
    %252 = vector.load %arg8[%251, %c0_158] : memref<8x128xf32, #tpu.memory_space<vmem>>, vector<1x128xf32>
    tpu.vector_store %arg8[%251, %c0_158], %250 {strides = array<i32>} : memref<8x128xf32, #tpu.memory_space<vmem>>, vector<1x128xf32>,
    %c6_i32_159 = arith.constant 6 : i32
    %c8_i32_160 = arith.constant 8 : i32
    %253 = arith.muli %c6_i32_159, %c8_i32_160 : i32
    %254 = arith.addi %0, %253 : i32
    %c2_i32_161 = arith.constant 2 : i32
    %255 = arith.addi %254, %c2_i32_161 : i32
    %256 = arith.index_cast %255 : i32 to index
    %257 = memref.load %arg1[%256] : memref<64xi32, #tpu.memory_space<smem>>
    %c0_i32_162 = arith.constant 0 : i32
    %c39_i32_163 = arith.constant 39 : i32
    %258 = arith.maxsi %c0_i32_162, %257 : i32
    %259 = arith.minsi %c39_i32_163, %258 : i32
    %260 = arith.index_cast %259 : i32 to index
    %c0_164 = arith.constant 0 : index
    %261 = vector.load %arg2[%260, %c0_164] : memref<40x128xf32, #tpu.memory_space<vmem>>, vector<1x128xf32>
    %262 = arith.index_cast %c6_i32_159 : i32 to index
    %c0_165 = arith.constant 0 : index
    %263 = vector.load %arg8[%262, %c0_165] : memref<8x128xf32, #tpu.memory_space<vmem>>, vector<1x128xf32>
    tpu.vector_store %arg8[%262, %c0_165], %261 {strides = array<i32>} : memref<8x128xf32, #tpu.memory_space<vmem>>, vector<1x128xf32>,
    %c7_i32_166 = arith.constant 7 : i32
    %c8_i32_167 = arith.constant 8 : i32
    %264 = arith.muli %c7_i32_166, %c8_i32_167 : i32
    %265 = arith.addi %0, %264 : i32
    %c2_i32_168 = arith.constant 2 : i32
    %266 = arith.addi %265, %c2_i32_168 : i32
    %267 = arith.index_cast %266 : i32 to index
    %268 = memref.load %arg1[%267] : memref<64xi32, #tpu.memory_space<smem>>
    %c0_i32_169 = arith.constant 0 : i32
    %c39_i32_170 = arith.constant 39 : i32
    %269 = arith.maxsi %c0_i32_169, %268 : i32
    %270 = arith.minsi %c39_i32_170, %269 : i32
    %271 = arith.index_cast %270 : i32 to index
    %c0_171 = arith.constant 0 : index
    %272 = vector.load %arg2[%271, %c0_171] : memref<40x128xf32, #tpu.memory_space<vmem>>, vector<1x128xf32>
    %273 = arith.index_cast %c7_i32_166 : i32 to index
    %c0_172 = arith.constant 0 : index
    %274 = vector.load %arg8[%273, %c0_172] : memref<8x128xf32, #tpu.memory_space<vmem>>, vector<1x128xf32>
    tpu.vector_store %arg8[%273, %c0_172], %272 {strides = array<i32>} : memref<8x128xf32, #tpu.memory_space<vmem>>, vector<1x128xf32>,
    %c8_i32_173 = arith.constant 8 : i32
    %c0_174 = arith.constant 0 : index
    %c0_175 = arith.constant 0 : index
    %275 = vector.load %arg9[%c0_174, %c0_175] : memref<8x128xf32, #tpu.memory_space<vmem>>, vector<8x128xf32>
    %c0_176 = arith.constant 0 : index
    %c0_177 = arith.constant 0 : index
    %276 = vector.load %arg8[%c0_176, %c0_177] : memref<8x128xf32, #tpu.memory_space<vmem>>, vector<8x128xf32>
    %277 = arith.addf %275, %276 : vector<8x128xf32>
    %c0_178 = arith.constant 0 : index
    %c0_179 = arith.constant 0 : index
    %278 = vector.load %arg9[%c0_178, %c0_179] : memref<8x128xf32, #tpu.memory_space<vmem>>, vector<8x128xf32>
    tpu.vector_store %arg9[%c0_178, %c0_179], %277 {strides = array<i32>} : memref<8x128xf32, #tpu.memory_space<vmem>>, vector<8x128xf32>,
    %c0_i32_180 = arith.constant 0 : i32
    %c8_i32_181 = arith.constant 8 : i32
    %279 = arith.muli %c0_i32_180, %c8_i32_181 : i32
    %280 = arith.addi %0, %279 : i32
    %c3_i32_182 = arith.constant 3 : i32
    %281 = arith.addi %280, %c3_i32_182 : i32
    %282 = arith.index_cast %281 : i32 to index
    %283 = memref.load %arg1[%282] : memref<64xi32, #tpu.memory_space<smem>>
    %c0_i32_183 = arith.constant 0 : i32
    %c39_i32_184 = arith.constant 39 : i32
    %284 = arith.maxsi %c0_i32_183, %283 : i32
    %285 = arith.minsi %c39_i32_184, %284 : i32
    %286 = arith.index_cast %285 : i32 to index
    %c0_185 = arith.constant 0 : index
    %287 = vector.load %arg2[%286, %c0_185] : memref<40x128xf32, #tpu.memory_space<vmem>>, vector<1x128xf32>
    %288 = arith.index_cast %c0_i32_180 : i32 to index
    %c0_186 = arith.constant 0 : index
    %289 = vector.load %arg8[%288, %c0_186] : memref<8x128xf32, #tpu.memory_space<vmem>>, vector<1x128xf32>
    tpu.vector_store %arg8[%288, %c0_186], %287 {strides = array<i32>} : memref<8x128xf32, #tpu.memory_space<vmem>>, vector<1x128xf32>,
    %c1_i32_187 = arith.constant 1 : i32
    %c8_i32_188 = arith.constant 8 : i32
    %290 = arith.muli %c1_i32_187, %c8_i32_188 : i32
    %291 = arith.addi %0, %290 : i32
    %c3_i32_189 = arith.constant 3 : i32
    %292 = arith.addi %291, %c3_i32_189 : i32
    %293 = arith.index_cast %292 : i32 to index
    %294 = memref.load %arg1[%293] : memref<64xi32, #tpu.memory_space<smem>>
    %c0_i32_190 = arith.constant 0 : i32
    %c39_i32_191 = arith.constant 39 : i32
    %295 = arith.maxsi %c0_i32_190, %294 : i32
    %296 = arith.minsi %c39_i32_191, %295 : i32
    %297 = arith.index_cast %296 : i32 to index
    %c0_192 = arith.constant 0 : index
    %298 = vector.load %arg2[%297, %c0_192] : memref<40x128xf32, #tpu.memory_space<vmem>>, vector<1x128xf32>
    %299 = arith.index_cast %c1_i32_187 : i32 to index
    %c0_193 = arith.constant 0 : index
    %300 = vector.load %arg8[%299, %c0_193] : memref<8x128xf32, #tpu.memory_space<vmem>>, vector<1x128xf32>
    tpu.vector_store %arg8[%299, %c0_193], %298 {strides = array<i32>} : memref<8x128xf32, #tpu.memory_space<vmem>>, vector<1x128xf32>,
    %c2_i32_194 = arith.constant 2 : i32
    %c8_i32_195 = arith.constant 8 : i32
    %301 = arith.muli %c2_i32_194, %c8_i32_195 : i32
    %302 = arith.addi %0, %301 : i32
    %c3_i32_196 = arith.constant 3 : i32
    %303 = arith.addi %302, %c3_i32_196 : i32
    %304 = arith.index_cast %303 : i32 to index
    %305 = memref.load %arg1[%304] : memref<64xi32, #tpu.memory_space<smem>>
    %c0_i32_197 = arith.constant 0 : i32
    %c39_i32_198 = arith.constant 39 : i32
    %306 = arith.maxsi %c0_i32_197, %305 : i32
    %307 = arith.minsi %c39_i32_198, %306 : i32
    %308 = arith.index_cast %307 : i32 to index
    %c0_199 = arith.constant 0 : index
    %309 = vector.load %arg2[%308, %c0_199] : memref<40x128xf32, #tpu.memory_space<vmem>>, vector<1x128xf32>
    %310 = arith.index_cast %c2_i32_194 : i32 to index
    %c0_200 = arith.constant 0 : index
    %311 = vector.load %arg8[%310, %c0_200] : memref<8x128xf32, #tpu.memory_space<vmem>>, vector<1x128xf32>
    tpu.vector_store %arg8[%310, %c0_200], %309 {strides = array<i32>} : memref<8x128xf32, #tpu.memory_space<vmem>>, vector<1x128xf32>,
    %c3_i32_201 = arith.constant 3 : i32
    %c8_i32_202 = arith.constant 8 : i32
    %312 = arith.muli %c3_i32_201, %c8_i32_202 : i32
    %313 = arith.addi %0, %312 : i32
    %c3_i32_203 = arith.constant 3 : i32
    %314 = arith.addi %313, %c3_i32_203 : i32
    %315 = arith.index_cast %314 : i32 to index
    %316 = memref.load %arg1[%315] : memref<64xi32, #tpu.memory_space<smem>>
    %c0_i32_204 = arith.constant 0 : i32
    %c39_i32_205 = arith.constant 39 : i32
    %317 = arith.maxsi %c0_i32_204, %316 : i32
    %318 = arith.minsi %c39_i32_205, %317 : i32
    %319 = arith.index_cast %318 : i32 to index
    %c0_206 = arith.constant 0 : index
    %320 = vector.load %arg2[%319, %c0_206] : memref<40x128xf32, #tpu.memory_space<vmem>>, vector<1x128xf32>
    %321 = arith.index_cast %c3_i32_201 : i32 to index
    %c0_207 = arith.constant 0 : index
    %322 = vector.load %arg8[%321, %c0_207] : memref<8x128xf32, #tpu.memory_space<vmem>>, vector<1x128xf32>
    tpu.vector_store %arg8[%321, %c0_207], %320 {strides = array<i32>} : memref<8x128xf32, #tpu.memory_space<vmem>>, vector<1x128xf32>,
    %c4_i32_208 = arith.constant 4 : i32
    %c8_i32_209 = arith.constant 8 : i32
    %323 = arith.muli %c4_i32_208, %c8_i32_209 : i32
    %324 = arith.addi %0, %323 : i32
    %c3_i32_210 = arith.constant 3 : i32
    %325 = arith.addi %324, %c3_i32_210 : i32
    %326 = arith.index_cast %325 : i32 to index
    %327 = memref.load %arg1[%326] : memref<64xi32, #tpu.memory_space<smem>>
    %c0_i32_211 = arith.constant 0 : i32
    %c39_i32_212 = arith.constant 39 : i32
    %328 = arith.maxsi %c0_i32_211, %327 : i32
    %329 = arith.minsi %c39_i32_212, %328 : i32
    %330 = arith.index_cast %329 : i32 to index
    %c0_213 = arith.constant 0 : index
    %331 = vector.load %arg2[%330, %c0_213] : memref<40x128xf32, #tpu.memory_space<vmem>>, vector<1x128xf32>
    %332 = arith.index_cast %c4_i32_208 : i32 to index
    %c0_214 = arith.constant 0 : index
    %333 = vector.load %arg8[%332, %c0_214] : memref<8x128xf32, #tpu.memory_space<vmem>>, vector<1x128xf32>
    tpu.vector_store %arg8[%332, %c0_214], %331 {strides = array<i32>} : memref<8x128xf32, #tpu.memory_space<vmem>>, vector<1x128xf32>,
    %c5_i32_215 = arith.constant 5 : i32
    %c8_i32_216 = arith.constant 8 : i32
    %334 = arith.muli %c5_i32_215, %c8_i32_216 : i32
    %335 = arith.addi %0, %334 : i32
    %c3_i32_217 = arith.constant 3 : i32
    %336 = arith.addi %335, %c3_i32_217 : i32
    %337 = arith.index_cast %336 : i32 to index
    %338 = memref.load %arg1[%337] : memref<64xi32, #tpu.memory_space<smem>>
    %c0_i32_218 = arith.constant 0 : i32
    %c39_i32_219 = arith.constant 39 : i32
    %339 = arith.maxsi %c0_i32_218, %338 : i32
    %340 = arith.minsi %c39_i32_219, %339 : i32
    %341 = arith.index_cast %340 : i32 to index
    %c0_220 = arith.constant 0 : index
    %342 = vector.load %arg2[%341, %c0_220] : memref<40x128xf32, #tpu.memory_space<vmem>>, vector<1x128xf32>
    %343 = arith.index_cast %c5_i32_215 : i32 to index
    %c0_221 = arith.constant 0 : index
    %344 = vector.load %arg8[%343, %c0_221] : memref<8x128xf32, #tpu.memory_space<vmem>>, vector<1x128xf32>
    tpu.vector_store %arg8[%343, %c0_221], %342 {strides = array<i32>} : memref<8x128xf32, #tpu.memory_space<vmem>>, vector<1x128xf32>,
    %c6_i32_222 = arith.constant 6 : i32
    %c8_i32_223 = arith.constant 8 : i32
    %345 = arith.muli %c6_i32_222, %c8_i32_223 : i32
    %346 = arith.addi %0, %345 : i32
    %c3_i32_224 = arith.constant 3 : i32
    %347 = arith.addi %346, %c3_i32_224 : i32
    %348 = arith.index_cast %347 : i32 to index
    %349 = memref.load %arg1[%348] : memref<64xi32, #tpu.memory_space<smem>>
    %c0_i32_225 = arith.constant 0 : i32
    %c39_i32_226 = arith.constant 39 : i32
    %350 = arith.maxsi %c0_i32_225, %349 : i32
    %351 = arith.minsi %c39_i32_226, %350 : i32
    %352 = arith.index_cast %351 : i32 to index
    %c0_227 = arith.constant 0 : index
    %353 = vector.load %arg2[%352, %c0_227] : memref<40x128xf32, #tpu.memory_space<vmem>>, vector<1x128xf32>
    %354 = arith.index_cast %c6_i32_222 : i32 to index
    %c0_228 = arith.constant 0 : index
    %355 = vector.load %arg8[%354, %c0_228] : memref<8x128xf32, #tpu.memory_space<vmem>>, vector<1x128xf32>
    tpu.vector_store %arg8[%354, %c0_228], %353 {strides = array<i32>} : memref<8x128xf32, #tpu.memory_space<vmem>>, vector<1x128xf32>,
    %c7_i32_229 = arith.constant 7 : i32
    %c8_i32_230 = arith.constant 8 : i32
    %356 = arith.muli %c7_i32_229, %c8_i32_230 : i32
    %357 = arith.addi %0, %356 : i32
    %c3_i32_231 = arith.constant 3 : i32
    %358 = arith.addi %357, %c3_i32_231 : i32
    %359 = arith.index_cast %358 : i32 to index
    %360 = memref.load %arg1[%359] : memref<64xi32, #tpu.memory_space<smem>>
    %c0_i32_232 = arith.constant 0 : i32
    %c39_i32_233 = arith.constant 39 : i32
    %361 = arith.maxsi %c0_i32_232, %360 : i32
    %362 = arith.minsi %c39_i32_233, %361 : i32
    %363 = arith.index_cast %362 : i32 to index
    %c0_234 = arith.constant 0 : index
    %364 = vector.load %arg2[%363, %c0_234] : memref<40x128xf32, #tpu.memory_space<vmem>>, vector<1x128xf32>
    %365 = arith.index_cast %c7_i32_229 : i32 to index
    %c0_235 = arith.constant 0 : index
    %366 = vector.load %arg8[%365, %c0_235] : memref<8x128xf32, #tpu.memory_space<vmem>>, vector<1x128xf32>
    tpu.vector_store %arg8[%365, %c0_235], %364 {strides = array<i32>} : memref<8x128xf32, #tpu.memory_space<vmem>>, vector<1x128xf32>,
    %c8_i32_236 = arith.constant 8 : i32
    %c0_237 = arith.constant 0 : index
    %c0_238 = arith.constant 0 : index
    %367 = vector.load %arg9[%c0_237, %c0_238] : memref<8x128xf32, #tpu.memory_space<vmem>>, vector<8x128xf32>
    %c0_239 = arith.constant 0 : index
    %c0_240 = arith.constant 0 : index
    %368 = vector.load %arg8[%c0_239, %c0_240] : memref<8x128xf32, #tpu.memory_space<vmem>>, vector<8x128xf32>
    %369 = arith.addf %367, %368 : vector<8x128xf32>
    %c0_241 = arith.constant 0 : index
    %c0_242 = arith.constant 0 : index
    %370 = vector.load %arg9[%c0_241, %c0_242] : memref<8x128xf32, #tpu.memory_space<vmem>>, vector<8x128xf32>
    tpu.vector_store %arg9[%c0_241, %c0_242], %369 {strides = array<i32>} : memref<8x128xf32, #tpu.memory_space<vmem>>, vector<8x128xf32>,
    %c0_i32_243 = arith.constant 0 : i32
    %c8_i32_244 = arith.constant 8 : i32
    %371 = arith.muli %c0_i32_243, %c8_i32_244 : i32
    %372 = arith.addi %0, %371 : i32
    %c4_i32_245 = arith.constant 4 : i32
    %373 = arith.addi %372, %c4_i32_245 : i32
    %374 = arith.index_cast %373 : i32 to index
    %375 = memref.load %arg1[%374] : memref<64xi32, #tpu.memory_space<smem>>
    %c0_i32_246 = arith.constant 0 : i32
    %c39_i32_247 = arith.constant 39 : i32
    %376 = arith.maxsi %c0_i32_246, %375 : i32
    %377 = arith.minsi %c39_i32_247, %376 : i32
    %378 = arith.index_cast %377 : i32 to index
    %c0_248 = arith.constant 0 : index
    %379 = vector.load %arg2[%378, %c0_248] : memref<40x128xf32, #tpu.memory_space<vmem>>, vector<1x128xf32>
    %380 = arith.index_cast %c0_i32_243 : i32 to index
    %c0_249 = arith.constant 0 : index
    %381 = vector.load %arg8[%380, %c0_249] : memref<8x128xf32, #tpu.memory_space<vmem>>, vector<1x128xf32>
    tpu.vector_store %arg8[%380, %c0_249], %379 {strides = array<i32>} : memref<8x128xf32, #tpu.memory_space<vmem>>, vector<1x128xf32>,
    %c1_i32_250 = arith.constant 1 : i32
    %c8_i32_251 = arith.constant 8 : i32
    %382 = arith.muli %c1_i32_250, %c8_i32_251 : i32
    %383 = arith.addi %0, %382 : i32
    %c4_i32_252 = arith.constant 4 : i32
    %384 = arith.addi %383, %c4_i32_252 : i32
    %385 = arith.index_cast %384 : i32 to index
    %386 = memref.load %arg1[%385] : memref<64xi32, #tpu.memory_space<smem>>
    %c0_i32_253 = arith.constant 0 : i32
    %c39_i32_254 = arith.constant 39 : i32
    %387 = arith.maxsi %c0_i32_253, %386 : i32
    %388 = arith.minsi %c39_i32_254, %387 : i32
    %389 = arith.index_cast %388 : i32 to index
    %c0_255 = arith.constant 0 : index
    %390 = vector.load %arg2[%389, %c0_255] : memref<40x128xf32, #tpu.memory_space<vmem>>, vector<1x128xf32>
    %391 = arith.index_cast %c1_i32_250 : i32 to index
    %c0_256 = arith.constant 0 : index
    %392 = vector.load %arg8[%391, %c0_256] : memref<8x128xf32, #tpu.memory_space<vmem>>, vector<1x128xf32>
    tpu.vector_store %arg8[%391, %c0_256], %390 {strides = array<i32>} : memref<8x128xf32, #tpu.memory_space<vmem>>, vector<1x128xf32>,
    %c2_i32_257 = arith.constant 2 : i32
    %c8_i32_258 = arith.constant 8 : i32
    %393 = arith.muli %c2_i32_257, %c8_i32_258 : i32
    %394 = arith.addi %0, %393 : i32
    %c4_i32_259 = arith.constant 4 : i32
    %395 = arith.addi %394, %c4_i32_259 : i32
    %396 = arith.index_cast %395 : i32 to index
    %397 = memref.load %arg1[%396] : memref<64xi32, #tpu.memory_space<smem>>
    %c0_i32_260 = arith.constant 0 : i32
    %c39_i32_261 = arith.constant 39 : i32
    %398 = arith.maxsi %c0_i32_260, %397 : i32
    %399 = arith.minsi %c39_i32_261, %398 : i32
    %400 = arith.index_cast %399 : i32 to index
    %c0_262 = arith.constant 0 : index
    %401 = vector.load %arg2[%400, %c0_262] : memref<40x128xf32, #tpu.memory_space<vmem>>, vector<1x128xf32>
    %402 = arith.index_cast %c2_i32_257 : i32 to index
    %c0_263 = arith.constant 0 : index
    %403 = vector.load %arg8[%402, %c0_263] : memref<8x128xf32, #tpu.memory_space<vmem>>, vector<1x128xf32>
    tpu.vector_store %arg8[%402, %c0_263], %401 {strides = array<i32>} : memref<8x128xf32, #tpu.memory_space<vmem>>, vector<1x128xf32>,
    %c3_i32_264 = arith.constant 3 : i32
    %c8_i32_265 = arith.constant 8 : i32
    %404 = arith.muli %c3_i32_264, %c8_i32_265 : i32
    %405 = arith.addi %0, %404 : i32
    %c4_i32_266 = arith.constant 4 : i32
    %406 = arith.addi %405, %c4_i32_266 : i32
    %407 = arith.index_cast %406 : i32 to index
    %408 = memref.load %arg1[%407] : memref<64xi32, #tpu.memory_space<smem>>
    %c0_i32_267 = arith.constant 0 : i32
    %c39_i32_268 = arith.constant 39 : i32
    %409 = arith.maxsi %c0_i32_267, %408 : i32
    %410 = arith.minsi %c39_i32_268, %409 : i32
    %411 = arith.index_cast %410 : i32 to index
    %c0_269 = arith.constant 0 : index
    %412 = vector.load %arg2[%411, %c0_269] : memref<40x128xf32, #tpu.memory_space<vmem>>, vector<1x128xf32>
    %413 = arith.index_cast %c3_i32_264 : i32 to index
    %c0_270 = arith.constant 0 : index
    %414 = vector.load %arg8[%413, %c0_270] : memref<8x128xf32, #tpu.memory_space<vmem>>, vector<1x128xf32>
    tpu.vector_store %arg8[%413, %c0_270], %412 {strides = array<i32>} : memref<8x128xf32, #tpu.memory_space<vmem>>, vector<1x128xf32>,
    %c4_i32_271 = arith.constant 4 : i32
    %c8_i32_272 = arith.constant 8 : i32
    %415 = arith.muli %c4_i32_271, %c8_i32_272 : i32
    %416 = arith.addi %0, %415 : i32
    %c4_i32_273 = arith.constant 4 : i32
    %417 = arith.addi %416, %c4_i32_273 : i32
    %418 = arith.index_cast %417 : i32 to index
    %419 = memref.load %arg1[%418] : memref<64xi32, #tpu.memory_space<smem>>
    %c0_i32_274 = arith.constant 0 : i32
    %c39_i32_275 = arith.constant 39 : i32
    %420 = arith.maxsi %c0_i32_274, %419 : i32
    %421 = arith.minsi %c39_i32_275, %420 : i32
    %422 = arith.index_cast %421 : i32 to index
    %c0_276 = arith.constant 0 : index
    %423 = vector.load %arg2[%422, %c0_276] : memref<40x128xf32, #tpu.memory_space<vmem>>, vector<1x128xf32>
    %424 = arith.index_cast %c4_i32_271 : i32 to index
    %c0_277 = arith.constant 0 : index
    %425 = vector.load %arg8[%424, %c0_277] : memref<8x128xf32, #tpu.memory_space<vmem>>, vector<1x128xf32>
    tpu.vector_store %arg8[%424, %c0_277], %423 {strides = array<i32>} : memref<8x128xf32, #tpu.memory_space<vmem>>, vector<1x128xf32>,
    %c5_i32_278 = arith.constant 5 : i32
    %c8_i32_279 = arith.constant 8 : i32
    %426 = arith.muli %c5_i32_278, %c8_i32_279 : i32
    %427 = arith.addi %0, %426 : i32
    %c4_i32_280 = arith.constant 4 : i32
    %428 = arith.addi %427, %c4_i32_280 : i32
    %429 = arith.index_cast %428 : i32 to index
    %430 = memref.load %arg1[%429] : memref<64xi32, #tpu.memory_space<smem>>
    %c0_i32_281 = arith.constant 0 : i32
    %c39_i32_282 = arith.constant 39 : i32
    %431 = arith.maxsi %c0_i32_281, %430 : i32
    %432 = arith.minsi %c39_i32_282, %431 : i32
    %433 = arith.index_cast %432 : i32 to index
    %c0_283 = arith.constant 0 : index
    %434 = vector.load %arg2[%433, %c0_283] : memref<40x128xf32, #tpu.memory_space<vmem>>, vector<1x128xf32>
    %435 = arith.index_cast %c5_i32_278 : i32 to index
    %c0_284 = arith.constant 0 : index
    %436 = vector.load %arg8[%435, %c0_284] : memref<8x128xf32, #tpu.memory_space<vmem>>, vector<1x128xf32>
    tpu.vector_store %arg8[%435, %c0_284], %434 {strides = array<i32>} : memref<8x128xf32, #tpu.memory_space<vmem>>, vector<1x128xf32>,
    %c6_i32_285 = arith.constant 6 : i32
    %c8_i32_286 = arith.constant 8 : i32
    %437 = arith.muli %c6_i32_285, %c8_i32_286 : i32
    %438 = arith.addi %0, %437 : i32
    %c4_i32_287 = arith.constant 4 : i32
    %439 = arith.addi %438, %c4_i32_287 : i32
    %440 = arith.index_cast %439 : i32 to index
    %441 = memref.load %arg1[%440] : memref<64xi32, #tpu.memory_space<smem>>
    %c0_i32_288 = arith.constant 0 : i32
    %c39_i32_289 = arith.constant 39 : i32
    %442 = arith.maxsi %c0_i32_288, %441 : i32
    %443 = arith.minsi %c39_i32_289, %442 : i32
    %444 = arith.index_cast %443 : i32 to index
    %c0_290 = arith.constant 0 : index
    %445 = vector.load %arg2[%444, %c0_290] : memref<40x128xf32, #tpu.memory_space<vmem>>, vector<1x128xf32>
    %446 = arith.index_cast %c6_i32_285 : i32 to index
    %c0_291 = arith.constant 0 : index
    %447 = vector.load %arg8[%446, %c0_291] : memref<8x128xf32, #tpu.memory_space<vmem>>, vector<1x128xf32>
    tpu.vector_store %arg8[%446, %c0_291], %445 {strides = array<i32>} : memref<8x128xf32, #tpu.memory_space<vmem>>, vector<1x128xf32>,
    %c7_i32_292 = arith.constant 7 : i32
    %c8_i32_293 = arith.constant 8 : i32
    %448 = arith.muli %c7_i32_292, %c8_i32_293 : i32
    %449 = arith.addi %0, %448 : i32
    %c4_i32_294 = arith.constant 4 : i32
    %450 = arith.addi %449, %c4_i32_294 : i32
    %451 = arith.index_cast %450 : i32 to index
    %452 = memref.load %arg1[%451] : memref<64xi32, #tpu.memory_space<smem>>
    %c0_i32_295 = arith.constant 0 : i32
    %c39_i32_296 = arith.constant 39 : i32
    %453 = arith.maxsi %c0_i32_295, %452 : i32
    %454 = arith.minsi %c39_i32_296, %453 : i32
    %455 = arith.index_cast %454 : i32 to index
    %c0_297 = arith.constant 0 : index
    %456 = vector.load %arg2[%455, %c0_297] : memref<40x128xf32, #tpu.memory_space<vmem>>, vector<1x128xf32>
    %457 = arith.index_cast %c7_i32_292 : i32 to index
    %c0_298 = arith.constant 0 : index
    %458 = vector.load %arg8[%457, %c0_298] : memref<8x128xf32, #tpu.memory_space<vmem>>, vector<1x128xf32>
    tpu.vector_store %arg8[%457, %c0_298], %456 {strides = array<i32>} : memref<8x128xf32, #tpu.memory_space<vmem>>, vector<1x128xf32>,
    %c8_i32_299 = arith.constant 8 : i32
    %c0_300 = arith.constant 0 : index
    %c0_301 = arith.constant 0 : index
    %459 = vector.load %arg9[%c0_300, %c0_301] : memref<8x128xf32, #tpu.memory_space<vmem>>, vector<8x128xf32>
    %c0_302 = arith.constant 0 : index
    %c0_303 = arith.constant 0 : index
    %460 = vector.load %arg8[%c0_302, %c0_303] : memref<8x128xf32, #tpu.memory_space<vmem>>, vector<8x128xf32>
    %461 = arith.addf %459, %460 : vector<8x128xf32>
    %c0_304 = arith.constant 0 : index
    %c0_305 = arith.constant 0 : index
    %462 = vector.load %arg9[%c0_304, %c0_305] : memref<8x128xf32, #tpu.memory_space<vmem>>, vector<8x128xf32>
    tpu.vector_store %arg9[%c0_304, %c0_305], %461 {strides = array<i32>} : memref<8x128xf32, #tpu.memory_space<vmem>>, vector<8x128xf32>,
    %c0_i32_306 = arith.constant 0 : i32
    %c8_i32_307 = arith.constant 8 : i32
    %463 = arith.muli %c0_i32_306, %c8_i32_307 : i32
    %464 = arith.addi %0, %463 : i32
    %c5_i32_308 = arith.constant 5 : i32
    %465 = arith.addi %464, %c5_i32_308 : i32
    %466 = arith.index_cast %465 : i32 to index
    %467 = memref.load %arg1[%466] : memref<64xi32, #tpu.memory_space<smem>>
    %c0_i32_309 = arith.constant 0 : i32
    %c39_i32_310 = arith.constant 39 : i32
    %468 = arith.maxsi %c0_i32_309, %467 : i32
    %469 = arith.minsi %c39_i32_310, %468 : i32
    %470 = arith.index_cast %469 : i32 to index
    %c0_311 = arith.constant 0 : index
    %471 = vector.load %arg2[%470, %c0_311] : memref<40x128xf32, #tpu.memory_space<vmem>>, vector<1x128xf32>
    %472 = arith.index_cast %c0_i32_306 : i32 to index
    %c0_312 = arith.constant 0 : index
    %473 = vector.load %arg8[%472, %c0_312] : memref<8x128xf32, #tpu.memory_space<vmem>>, vector<1x128xf32>
    tpu.vector_store %arg8[%472, %c0_312], %471 {strides = array<i32>} : memref<8x128xf32, #tpu.memory_space<vmem>>, vector<1x128xf32>,
    %c1_i32_313 = arith.constant 1 : i32
    %c8_i32_314 = arith.constant 8 : i32
    %474 = arith.muli %c1_i32_313, %c8_i32_314 : i32
    %475 = arith.addi %0, %474 : i32
    %c5_i32_315 = arith.constant 5 : i32
    %476 = arith.addi %475, %c5_i32_315 : i32
    %477 = arith.index_cast %476 : i32 to index
    %478 = memref.load %arg1[%477] : memref<64xi32, #tpu.memory_space<smem>>
    %c0_i32_316 = arith.constant 0 : i32
    %c39_i32_317 = arith.constant 39 : i32
    %479 = arith.maxsi %c0_i32_316, %478 : i32
    %480 = arith.minsi %c39_i32_317, %479 : i32
    %481 = arith.index_cast %480 : i32 to index
    %c0_318 = arith.constant 0 : index
    %482 = vector.load %arg2[%481, %c0_318] : memref<40x128xf32, #tpu.memory_space<vmem>>, vector<1x128xf32>
    %483 = arith.index_cast %c1_i32_313 : i32 to index
    %c0_319 = arith.constant 0 : index
    %484 = vector.load %arg8[%483, %c0_319] : memref<8x128xf32, #tpu.memory_space<vmem>>, vector<1x128xf32>
    tpu.vector_store %arg8[%483, %c0_319], %482 {strides = array<i32>} : memref<8x128xf32, #tpu.memory_space<vmem>>, vector<1x128xf32>,
    %c2_i32_320 = arith.constant 2 : i32
    %c8_i32_321 = arith.constant 8 : i32
    %485 = arith.muli %c2_i32_320, %c8_i32_321 : i32
    %486 = arith.addi %0, %485 : i32
    %c5_i32_322 = arith.constant 5 : i32
    %487 = arith.addi %486, %c5_i32_322 : i32
    %488 = arith.index_cast %487 : i32 to index
    %489 = memref.load %arg1[%488] : memref<64xi32, #tpu.memory_space<smem>>
    %c0_i32_323 = arith.constant 0 : i32
    %c39_i32_324 = arith.constant 39 : i32
    %490 = arith.maxsi %c0_i32_323, %489 : i32
    %491 = arith.minsi %c39_i32_324, %490 : i32
    %492 = arith.index_cast %491 : i32 to index
    %c0_325 = arith.constant 0 : index
    %493 = vector.load %arg2[%492, %c0_325] : memref<40x128xf32, #tpu.memory_space<vmem>>, vector<1x128xf32>
    %494 = arith.index_cast %c2_i32_320 : i32 to index
    %c0_326 = arith.constant 0 : index
    %495 = vector.load %arg8[%494, %c0_326] : memref<8x128xf32, #tpu.memory_space<vmem>>, vector<1x128xf32>
    tpu.vector_store %arg8[%494, %c0_326], %493 {strides = array<i32>} : memref<8x128xf32, #tpu.memory_space<vmem>>, vector<1x128xf32>,
    %c3_i32_327 = arith.constant 3 : i32
    %c8_i32_328 = arith.constant 8 : i32
    %496 = arith.muli %c3_i32_327, %c8_i32_328 : i32
    %497 = arith.addi %0, %496 : i32
    %c5_i32_329 = arith.constant 5 : i32
    %498 = arith.addi %497, %c5_i32_329 : i32
    %499 = arith.index_cast %498 : i32 to index
    %500 = memref.load %arg1[%499] : memref<64xi32, #tpu.memory_space<smem>>
    %c0_i32_330 = arith.constant 0 : i32
    %c39_i32_331 = arith.constant 39 : i32
    %501 = arith.maxsi %c0_i32_330, %500 : i32
    %502 = arith.minsi %c39_i32_331, %501 : i32
    %503 = arith.index_cast %502 : i32 to index
    %c0_332 = arith.constant 0 : index
    %504 = vector.load %arg2[%503, %c0_332] : memref<40x128xf32, #tpu.memory_space<vmem>>, vector<1x128xf32>
    %505 = arith.index_cast %c3_i32_327 : i32 to index
    %c0_333 = arith.constant 0 : index
    %506 = vector.load %arg8[%505, %c0_333] : memref<8x128xf32, #tpu.memory_space<vmem>>, vector<1x128xf32>
    tpu.vector_store %arg8[%505, %c0_333], %504 {strides = array<i32>} : memref<8x128xf32, #tpu.memory_space<vmem>>, vector<1x128xf32>,
    %c4_i32_334 = arith.constant 4 : i32
    %c8_i32_335 = arith.constant 8 : i32
    %507 = arith.muli %c4_i32_334, %c8_i32_335 : i32
    %508 = arith.addi %0, %507 : i32
    %c5_i32_336 = arith.constant 5 : i32
    %509 = arith.addi %508, %c5_i32_336 : i32
    %510 = arith.index_cast %509 : i32 to index
    %511 = memref.load %arg1[%510] : memref<64xi32, #tpu.memory_space<smem>>
    %c0_i32_337 = arith.constant 0 : i32
    %c39_i32_338 = arith.constant 39 : i32
    %512 = arith.maxsi %c0_i32_337, %511 : i32
    %513 = arith.minsi %c39_i32_338, %512 : i32
    %514 = arith.index_cast %513 : i32 to index
    %c0_339 = arith.constant 0 : index
    %515 = vector.load %arg2[%514, %c0_339] : memref<40x128xf32, #tpu.memory_space<vmem>>, vector<1x128xf32>
    %516 = arith.index_cast %c4_i32_334 : i32 to index
    %c0_340 = arith.constant 0 : index
    %517 = vector.load %arg8[%516, %c0_340] : memref<8x128xf32, #tpu.memory_space<vmem>>, vector<1x128xf32>
    tpu.vector_store %arg8[%516, %c0_340], %515 {strides = array<i32>} : memref<8x128xf32, #tpu.memory_space<vmem>>, vector<1x128xf32>,
    %c5_i32_341 = arith.constant 5 : i32
    %c8_i32_342 = arith.constant 8 : i32
    %518 = arith.muli %c5_i32_341, %c8_i32_342 : i32
    %519 = arith.addi %0, %518 : i32
    %c5_i32_343 = arith.constant 5 : i32
    %520 = arith.addi %519, %c5_i32_343 : i32
    %521 = arith.index_cast %520 : i32 to index
    %522 = memref.load %arg1[%521] : memref<64xi32, #tpu.memory_space<smem>>
    %c0_i32_344 = arith.constant 0 : i32
    %c39_i32_345 = arith.constant 39 : i32
    %523 = arith.maxsi %c0_i32_344, %522 : i32
    %524 = arith.minsi %c39_i32_345, %523 : i32
    %525 = arith.index_cast %524 : i32 to index
    %c0_346 = arith.constant 0 : index
    %526 = vector.load %arg2[%525, %c0_346] : memref<40x128xf32, #tpu.memory_space<vmem>>, vector<1x128xf32>
    %527 = arith.index_cast %c5_i32_341 : i32 to index
    %c0_347 = arith.constant 0 : index
    %528 = vector.load %arg8[%527, %c0_347] : memref<8x128xf32, #tpu.memory_space<vmem>>, vector<1x128xf32>
    tpu.vector_store %arg8[%527, %c0_347], %526 {strides = array<i32>} : memref<8x128xf32, #tpu.memory_space<vmem>>, vector<1x128xf32>,
    %c6_i32_348 = arith.constant 6 : i32
    %c8_i32_349 = arith.constant 8 : i32
    %529 = arith.muli %c6_i32_348, %c8_i32_349 : i32
    %530 = arith.addi %0, %529 : i32
    %c5_i32_350 = arith.constant 5 : i32
    %531 = arith.addi %530, %c5_i32_350 : i32
    %532 = arith.index_cast %531 : i32 to index
    %533 = memref.load %arg1[%532] : memref<64xi32, #tpu.memory_space<smem>>
    %c0_i32_351 = arith.constant 0 : i32
    %c39_i32_352 = arith.constant 39 : i32
    %534 = arith.maxsi %c0_i32_351, %533 : i32
    %535 = arith.minsi %c39_i32_352, %534 : i32
    %536 = arith.index_cast %535 : i32 to index
    %c0_353 = arith.constant 0 : index
    %537 = vector.load %arg2[%536, %c0_353] : memref<40x128xf32, #tpu.memory_space<vmem>>, vector<1x128xf32>
    %538 = arith.index_cast %c6_i32_348 : i32 to index
    %c0_354 = arith.constant 0 : index
    %539 = vector.load %arg8[%538, %c0_354] : memref<8x128xf32, #tpu.memory_space<vmem>>, vector<1x128xf32>
    tpu.vector_store %arg8[%538, %c0_354], %537 {strides = array<i32>} : memref<8x128xf32, #tpu.memory_space<vmem>>, vector<1x128xf32>,
    %c7_i32_355 = arith.constant 7 : i32
    %c8_i32_356 = arith.constant 8 : i32
    %540 = arith.muli %c7_i32_355, %c8_i32_356 : i32
    %541 = arith.addi %0, %540 : i32
    %c5_i32_357 = arith.constant 5 : i32
    %542 = arith.addi %541, %c5_i32_357 : i32
    %543 = arith.index_cast %542 : i32 to index
    %544 = memref.load %arg1[%543] : memref<64xi32, #tpu.memory_space<smem>>
    %c0_i32_358 = arith.constant 0 : i32
    %c39_i32_359 = arith.constant 39 : i32
    %545 = arith.maxsi %c0_i32_358, %544 : i32
    %546 = arith.minsi %c39_i32_359, %545 : i32
    %547 = arith.index_cast %546 : i32 to index
    %c0_360 = arith.constant 0 : index
    %548 = vector.load %arg2[%547, %c0_360] : memref<40x128xf32, #tpu.memory_space<vmem>>, vector<1x128xf32>
    %549 = arith.index_cast %c7_i32_355 : i32 to index
    %c0_361 = arith.constant 0 : index
    %550 = vector.load %arg8[%549, %c0_361] : memref<8x128xf32, #tpu.memory_space<vmem>>, vector<1x128xf32>
    tpu.vector_store %arg8[%549, %c0_361], %548 {strides = array<i32>} : memref<8x128xf32, #tpu.memory_space<vmem>>, vector<1x128xf32>,
    %c8_i32_362 = arith.constant 8 : i32
    %c0_363 = arith.constant 0 : index
    %c0_364 = arith.constant 0 : index
    %551 = vector.load %arg9[%c0_363, %c0_364] : memref<8x128xf32, #tpu.memory_space<vmem>>, vector<8x128xf32>
    %c0_365 = arith.constant 0 : index
    %c0_366 = arith.constant 0 : index
    %552 = vector.load %arg8[%c0_365, %c0_366] : memref<8x128xf32, #tpu.memory_space<vmem>>, vector<8x128xf32>
    %553 = arith.addf %551, %552 : vector<8x128xf32>
    %c0_367 = arith.constant 0 : index
    %c0_368 = arith.constant 0 : index
    %554 = vector.load %arg9[%c0_367, %c0_368] : memref<8x128xf32, #tpu.memory_space<vmem>>, vector<8x128xf32>
    tpu.vector_store %arg9[%c0_367, %c0_368], %553 {strides = array<i32>} : memref<8x128xf32, #tpu.memory_space<vmem>>, vector<8x128xf32>,
    %c0_i32_369 = arith.constant 0 : i32
    %c8_i32_370 = arith.constant 8 : i32
    %555 = arith.muli %c0_i32_369, %c8_i32_370 : i32
    %556 = arith.addi %0, %555 : i32
    %c6_i32_371 = arith.constant 6 : i32
    %557 = arith.addi %556, %c6_i32_371 : i32
    %558 = arith.index_cast %557 : i32 to index
    %559 = memref.load %arg1[%558] : memref<64xi32, #tpu.memory_space<smem>>
    %c0_i32_372 = arith.constant 0 : i32
    %c39_i32_373 = arith.constant 39 : i32
    %560 = arith.maxsi %c0_i32_372, %559 : i32
    %561 = arith.minsi %c39_i32_373, %560 : i32
    %562 = arith.index_cast %561 : i32 to index
    %c0_374 = arith.constant 0 : index
    %563 = vector.load %arg2[%562, %c0_374] : memref<40x128xf32, #tpu.memory_space<vmem>>, vector<1x128xf32>
    %564 = arith.index_cast %c0_i32_369 : i32 to index
    %c0_375 = arith.constant 0 : index
    %565 = vector.load %arg8[%564, %c0_375] : memref<8x128xf32, #tpu.memory_space<vmem>>, vector<1x128xf32>
    tpu.vector_store %arg8[%564, %c0_375], %563 {strides = array<i32>} : memref<8x128xf32, #tpu.memory_space<vmem>>, vector<1x128xf32>,
    %c1_i32_376 = arith.constant 1 : i32
    %c8_i32_377 = arith.constant 8 : i32
    %566 = arith.muli %c1_i32_376, %c8_i32_377 : i32
    %567 = arith.addi %0, %566 : i32
    %c6_i32_378 = arith.constant 6 : i32
    %568 = arith.addi %567, %c6_i32_378 : i32
    %569 = arith.index_cast %568 : i32 to index
    %570 = memref.load %arg1[%569] : memref<64xi32, #tpu.memory_space<smem>>
    %c0_i32_379 = arith.constant 0 : i32
    %c39_i32_380 = arith.constant 39 : i32
    %571 = arith.maxsi %c0_i32_379, %570 : i32
    %572 = arith.minsi %c39_i32_380, %571 : i32
    %573 = arith.index_cast %572 : i32 to index
    %c0_381 = arith.constant 0 : index
    %574 = vector.load %arg2[%573, %c0_381] : memref<40x128xf32, #tpu.memory_space<vmem>>, vector<1x128xf32>
    %575 = arith.index_cast %c1_i32_376 : i32 to index
    %c0_382 = arith.constant 0 : index
    %576 = vector.load %arg8[%575, %c0_382] : memref<8x128xf32, #tpu.memory_space<vmem>>, vector<1x128xf32>
    tpu.vector_store %arg8[%575, %c0_382], %574 {strides = array<i32>} : memref<8x128xf32, #tpu.memory_space<vmem>>, vector<1x128xf32>,
    %c2_i32_383 = arith.constant 2 : i32
    %c8_i32_384 = arith.constant 8 : i32
    %577 = arith.muli %c2_i32_383, %c8_i32_384 : i32
    %578 = arith.addi %0, %577 : i32
    %c6_i32_385 = arith.constant 6 : i32
    %579 = arith.addi %578, %c6_i32_385 : i32
    %580 = arith.index_cast %579 : i32 to index
    %581 = memref.load %arg1[%580] : memref<64xi32, #tpu.memory_space<smem>>
    %c0_i32_386 = arith.constant 0 : i32
    %c39_i32_387 = arith.constant 39 : i32
    %582 = arith.maxsi %c0_i32_386, %581 : i32
    %583 = arith.minsi %c39_i32_387, %582 : i32
    %584 = arith.index_cast %583 : i32 to index
    %c0_388 = arith.constant 0 : index
    %585 = vector.load %arg2[%584, %c0_388] : memref<40x128xf32, #tpu.memory_space<vmem>>, vector<1x128xf32>
    %586 = arith.index_cast %c2_i32_383 : i32 to index
    %c0_389 = arith.constant 0 : index
    %587 = vector.load %arg8[%586, %c0_389] : memref<8x128xf32, #tpu.memory_space<vmem>>, vector<1x128xf32>
    tpu.vector_store %arg8[%586, %c0_389], %585 {strides = array<i32>} : memref<8x128xf32, #tpu.memory_space<vmem>>, vector<1x128xf32>,
    %c3_i32_390 = arith.constant 3 : i32
    %c8_i32_391 = arith.constant 8 : i32
    %588 = arith.muli %c3_i32_390, %c8_i32_391 : i32
    %589 = arith.addi %0, %588 : i32
    %c6_i32_392 = arith.constant 6 : i32
    %590 = arith.addi %589, %c6_i32_392 : i32
    %591 = arith.index_cast %590 : i32 to index
    %592 = memref.load %arg1[%591] : memref<64xi32, #tpu.memory_space<smem>>
    %c0_i32_393 = arith.constant 0 : i32
    %c39_i32_394 = arith.constant 39 : i32
    %593 = arith.maxsi %c0_i32_393, %592 : i32
    %594 = arith.minsi %c39_i32_394, %593 : i32
    %595 = arith.index_cast %594 : i32 to index
    %c0_395 = arith.constant 0 : index
    %596 = vector.load %arg2[%595, %c0_395] : memref<40x128xf32, #tpu.memory_space<vmem>>, vector<1x128xf32>
    %597 = arith.index_cast %c3_i32_390 : i32 to index
    %c0_396 = arith.constant 0 : index
    %598 = vector.load %arg8[%597, %c0_396] : memref<8x128xf32, #tpu.memory_space<vmem>>, vector<1x128xf32>
    tpu.vector_store %arg8[%597, %c0_396], %596 {strides = array<i32>} : memref<8x128xf32, #tpu.memory_space<vmem>>, vector<1x128xf32>,
    %c4_i32_397 = arith.constant 4 : i32
    %c8_i32_398 = arith.constant 8 : i32
    %599 = arith.muli %c4_i32_397, %c8_i32_398 : i32
    %600 = arith.addi %0, %599 : i32
    %c6_i32_399 = arith.constant 6 : i32
    %601 = arith.addi %600, %c6_i32_399 : i32
    %602 = arith.index_cast %601 : i32 to index
    %603 = memref.load %arg1[%602] : memref<64xi32, #tpu.memory_space<smem>>
    %c0_i32_400 = arith.constant 0 : i32
    %c39_i32_401 = arith.constant 39 : i32
    %604 = arith.maxsi %c0_i32_400, %603 : i32
    %605 = arith.minsi %c39_i32_401, %604 : i32
    %606 = arith.index_cast %605 : i32 to index
    %c0_402 = arith.constant 0 : index
    %607 = vector.load %arg2[%606, %c0_402] : memref<40x128xf32, #tpu.memory_space<vmem>>, vector<1x128xf32>
    %608 = arith.index_cast %c4_i32_397 : i32 to index
    %c0_403 = arith.constant 0 : index
    %609 = vector.load %arg8[%608, %c0_403] : memref<8x128xf32, #tpu.memory_space<vmem>>, vector<1x128xf32>
    tpu.vector_store %arg8[%608, %c0_403], %607 {strides = array<i32>} : memref<8x128xf32, #tpu.memory_space<vmem>>, vector<1x128xf32>,
    %c5_i32_404 = arith.constant 5 : i32
    %c8_i32_405 = arith.constant 8 : i32
    %610 = arith.muli %c5_i32_404, %c8_i32_405 : i32
    %611 = arith.addi %0, %610 : i32
    %c6_i32_406 = arith.constant 6 : i32
    %612 = arith.addi %611, %c6_i32_406 : i32
    %613 = arith.index_cast %612 : i32 to index
    %614 = memref.load %arg1[%613] : memref<64xi32, #tpu.memory_space<smem>>
    %c0_i32_407 = arith.constant 0 : i32
    %c39_i32_408 = arith.constant 39 : i32
    %615 = arith.maxsi %c0_i32_407, %614 : i32
    %616 = arith.minsi %c39_i32_408, %615 : i32
    %617 = arith.index_cast %616 : i32 to index
    %c0_409 = arith.constant 0 : index
    %618 = vector.load %arg2[%617, %c0_409] : memref<40x128xf32, #tpu.memory_space<vmem>>, vector<1x128xf32>
    %619 = arith.index_cast %c5_i32_404 : i32 to index
    %c0_410 = arith.constant 0 : index
    %620 = vector.load %arg8[%619, %c0_410] : memref<8x128xf32, #tpu.memory_space<vmem>>, vector<1x128xf32>
    tpu.vector_store %arg8[%619, %c0_410], %618 {strides = array<i32>} : memref<8x128xf32, #tpu.memory_space<vmem>>, vector<1x128xf32>,
    %c6_i32_411 = arith.constant 6 : i32
    %c8_i32_412 = arith.constant 8 : i32
    %621 = arith.muli %c6_i32_411, %c8_i32_412 : i32
    %622 = arith.addi %0, %621 : i32
    %c6_i32_413 = arith.constant 6 : i32
    %623 = arith.addi %622, %c6_i32_413 : i32
    %624 = arith.index_cast %623 : i32 to index
    %625 = memref.load %arg1[%624] : memref<64xi32, #tpu.memory_space<smem>>
    %c0_i32_414 = arith.constant 0 : i32
    %c39_i32_415 = arith.constant 39 : i32
    %626 = arith.maxsi %c0_i32_414, %625 : i32
    %627 = arith.minsi %c39_i32_415, %626 : i32
    %628 = arith.index_cast %627 : i32 to index
    %c0_416 = arith.constant 0 : index
    %629 = vector.load %arg2[%628, %c0_416] : memref<40x128xf32, #tpu.memory_space<vmem>>, vector<1x128xf32>
    %630 = arith.index_cast %c6_i32_411 : i32 to index
    %c0_417 = arith.constant 0 : index
    %631 = vector.load %arg8[%630, %c0_417] : memref<8x128xf32, #tpu.memory_space<vmem>>, vector<1x128xf32>
    tpu.vector_store %arg8[%630, %c0_417], %629 {strides = array<i32>} : memref<8x128xf32, #tpu.memory_space<vmem>>, vector<1x128xf32>,
    %c7_i32_418 = arith.constant 7 : i32
    %c8_i32_419 = arith.constant 8 : i32
    %632 = arith.muli %c7_i32_418, %c8_i32_419 : i32
    %633 = arith.addi %0, %632 : i32
    %c6_i32_420 = arith.constant 6 : i32
    %634 = arith.addi %633, %c6_i32_420 : i32
    %635 = arith.index_cast %634 : i32 to index
    %636 = memref.load %arg1[%635] : memref<64xi32, #tpu.memory_space<smem>>
    %c0_i32_421 = arith.constant 0 : i32
    %c39_i32_422 = arith.constant 39 : i32
    %637 = arith.maxsi %c0_i32_421, %636 : i32
    %638 = arith.minsi %c39_i32_422, %637 : i32
    %639 = arith.index_cast %638 : i32 to index
    %c0_423 = arith.constant 0 : index
    %640 = vector.load %arg2[%639, %c0_423] : memref<40x128xf32, #tpu.memory_space<vmem>>, vector<1x128xf32>
    %641 = arith.index_cast %c7_i32_418 : i32 to index
    %c0_424 = arith.constant 0 : index
    %642 = vector.load %arg8[%641, %c0_424] : memref<8x128xf32, #tpu.memory_space<vmem>>, vector<1x128xf32>
    tpu.vector_store %arg8[%641, %c0_424], %640 {strides = array<i32>} : memref<8x128xf32, #tpu.memory_space<vmem>>, vector<1x128xf32>,
    %c8_i32_425 = arith.constant 8 : i32
    %c0_426 = arith.constant 0 : index
    %c0_427 = arith.constant 0 : index
    %643 = vector.load %arg9[%c0_426, %c0_427] : memref<8x128xf32, #tpu.memory_space<vmem>>, vector<8x128xf32>
    %c0_428 = arith.constant 0 : index
    %c0_429 = arith.constant 0 : index
    %644 = vector.load %arg8[%c0_428, %c0_429] : memref<8x128xf32, #tpu.memory_space<vmem>>, vector<8x128xf32>
    %645 = arith.addf %643, %644 : vector<8x128xf32>
    %c0_430 = arith.constant 0 : index
    %c0_431 = arith.constant 0 : index
    %646 = vector.load %arg9[%c0_430, %c0_431] : memref<8x128xf32, #tpu.memory_space<vmem>>, vector<8x128xf32>
    tpu.vector_store %arg9[%c0_430, %c0_431], %645 {strides = array<i32>} : memref<8x128xf32, #tpu.memory_space<vmem>>, vector<8x128xf32>,
    %c0_i32_432 = arith.constant 0 : i32
    %c8_i32_433 = arith.constant 8 : i32
    %647 = arith.muli %c0_i32_432, %c8_i32_433 : i32
    %648 = arith.addi %0, %647 : i32
    %c7_i32_434 = arith.constant 7 : i32
    %649 = arith.addi %648, %c7_i32_434 : i32
    %650 = arith.index_cast %649 : i32 to index
    %651 = memref.load %arg1[%650] : memref<64xi32, #tpu.memory_space<smem>>
    %c0_i32_435 = arith.constant 0 : i32
    %c39_i32_436 = arith.constant 39 : i32
    %652 = arith.maxsi %c0_i32_435, %651 : i32
    %653 = arith.minsi %c39_i32_436, %652 : i32
    %654 = arith.index_cast %653 : i32 to index
    %c0_437 = arith.constant 0 : index
    %655 = vector.load %arg2[%654, %c0_437] : memref<40x128xf32, #tpu.memory_space<vmem>>, vector<1x128xf32>
    %656 = arith.index_cast %c0_i32_432 : i32 to index
    %c0_438 = arith.constant 0 : index
    %657 = vector.load %arg8[%656, %c0_438] : memref<8x128xf32, #tpu.memory_space<vmem>>, vector<1x128xf32>
    tpu.vector_store %arg8[%656, %c0_438], %655 {strides = array<i32>} : memref<8x128xf32, #tpu.memory_space<vmem>>, vector<1x128xf32>,
    %c1_i32_439 = arith.constant 1 : i32
    %c8_i32_440 = arith.constant 8 : i32
    %658 = arith.muli %c1_i32_439, %c8_i32_440 : i32
    %659 = arith.addi %0, %658 : i32
    %c7_i32_441 = arith.constant 7 : i32
    %660 = arith.addi %659, %c7_i32_441 : i32
    %661 = arith.index_cast %660 : i32 to index
    %662 = memref.load %arg1[%661] : memref<64xi32, #tpu.memory_space<smem>>
    %c0_i32_442 = arith.constant 0 : i32
    %c39_i32_443 = arith.constant 39 : i32
    %663 = arith.maxsi %c0_i32_442, %662 : i32
    %664 = arith.minsi %c39_i32_443, %663 : i32
    %665 = arith.index_cast %664 : i32 to index
    %c0_444 = arith.constant 0 : index
    %666 = vector.load %arg2[%665, %c0_444] : memref<40x128xf32, #tpu.memory_space<vmem>>, vector<1x128xf32>
    %667 = arith.index_cast %c1_i32_439 : i32 to index
    %c0_445 = arith.constant 0 : index
    %668 = vector.load %arg8[%667, %c0_445] : memref<8x128xf32, #tpu.memory_space<vmem>>, vector<1x128xf32>
    tpu.vector_store %arg8[%667, %c0_445], %666 {strides = array<i32>} : memref<8x128xf32, #tpu.memory_space<vmem>>, vector<1x128xf32>,
    %c2_i32_446 = arith.constant 2 : i32
    %c8_i32_447 = arith.constant 8 : i32
    %669 = arith.muli %c2_i32_446, %c8_i32_447 : i32
    %670 = arith.addi %0, %669 : i32
    %c7_i32_448 = arith.constant 7 : i32
    %671 = arith.addi %670, %c7_i32_448 : i32
    %672 = arith.index_cast %671 : i32 to index
    %673 = memref.load %arg1[%672] : memref<64xi32, #tpu.memory_space<smem>>
    %c0_i32_449 = arith.constant 0 : i32
    %c39_i32_450 = arith.constant 39 : i32
    %674 = arith.maxsi %c0_i32_449, %673 : i32
    %675 = arith.minsi %c39_i32_450, %674 : i32
    %676 = arith.index_cast %675 : i32 to index
    %c0_451 = arith.constant 0 : index
    %677 = vector.load %arg2[%676, %c0_451] : memref<40x128xf32, #tpu.memory_space<vmem>>, vector<1x128xf32>
    %678 = arith.index_cast %c2_i32_446 : i32 to index
    %c0_452 = arith.constant 0 : index
    %679 = vector.load %arg8[%678, %c0_452] : memref<8x128xf32, #tpu.memory_space<vmem>>, vector<1x128xf32>
    tpu.vector_store %arg8[%678, %c0_452], %677 {strides = array<i32>} : memref<8x128xf32, #tpu.memory_space<vmem>>, vector<1x128xf32>,
    %c3_i32_453 = arith.constant 3 : i32
    %c8_i32_454 = arith.constant 8 : i32
    %680 = arith.muli %c3_i32_453, %c8_i32_454 : i32
    %681 = arith.addi %0, %680 : i32
    %c7_i32_455 = arith.constant 7 : i32
    %682 = arith.addi %681, %c7_i32_455 : i32
    %683 = arith.index_cast %682 : i32 to index
    %684 = memref.load %arg1[%683] : memref<64xi32, #tpu.memory_space<smem>>
    %c0_i32_456 = arith.constant 0 : i32
    %c39_i32_457 = arith.constant 39 : i32
    %685 = arith.maxsi %c0_i32_456, %684 : i32
    %686 = arith.minsi %c39_i32_457, %685 : i32
    %687 = arith.index_cast %686 : i32 to index
    %c0_458 = arith.constant 0 : index
    %688 = vector.load %arg2[%687, %c0_458] : memref<40x128xf32, #tpu.memory_space<vmem>>, vector<1x128xf32>
    %689 = arith.index_cast %c3_i32_453 : i32 to index
    %c0_459 = arith.constant 0 : index
    %690 = vector.load %arg8[%689, %c0_459] : memref<8x128xf32, #tpu.memory_space<vmem>>, vector<1x128xf32>
    tpu.vector_store %arg8[%689, %c0_459], %688 {strides = array<i32>} : memref<8x128xf32, #tpu.memory_space<vmem>>, vector<1x128xf32>,
    %c4_i32_460 = arith.constant 4 : i32
    %c8_i32_461 = arith.constant 8 : i32
    %691 = arith.muli %c4_i32_460, %c8_i32_461 : i32
    %692 = arith.addi %0, %691 : i32
    %c7_i32_462 = arith.constant 7 : i32
    %693 = arith.addi %692, %c7_i32_462 : i32
    %694 = arith.index_cast %693 : i32 to index
    %695 = memref.load %arg1[%694] : memref<64xi32, #tpu.memory_space<smem>>
    %c0_i32_463 = arith.constant 0 : i32
    %c39_i32_464 = arith.constant 39 : i32
    %696 = arith.maxsi %c0_i32_463, %695 : i32
    %697 = arith.minsi %c39_i32_464, %696 : i32
    %698 = arith.index_cast %697 : i32 to index
    %c0_465 = arith.constant 0 : index
    %699 = vector.load %arg2[%698, %c0_465] : memref<40x128xf32, #tpu.memory_space<vmem>>, vector<1x128xf32>
    %700 = arith.index_cast %c4_i32_460 : i32 to index
    %c0_466 = arith.constant 0 : index
    %701 = vector.load %arg8[%700, %c0_466] : memref<8x128xf32, #tpu.memory_space<vmem>>, vector<1x128xf32>
    tpu.vector_store %arg8[%700, %c0_466], %699 {strides = array<i32>} : memref<8x128xf32, #tpu.memory_space<vmem>>, vector<1x128xf32>,
    %c5_i32_467 = arith.constant 5 : i32
    %c8_i32_468 = arith.constant 8 : i32
    %702 = arith.muli %c5_i32_467, %c8_i32_468 : i32
    %703 = arith.addi %0, %702 : i32
    %c7_i32_469 = arith.constant 7 : i32
    %704 = arith.addi %703, %c7_i32_469 : i32
    %705 = arith.index_cast %704 : i32 to index
    %706 = memref.load %arg1[%705] : memref<64xi32, #tpu.memory_space<smem>>
    %c0_i32_470 = arith.constant 0 : i32
    %c39_i32_471 = arith.constant 39 : i32
    %707 = arith.maxsi %c0_i32_470, %706 : i32
    %708 = arith.minsi %c39_i32_471, %707 : i32
    %709 = arith.index_cast %708 : i32 to index
    %c0_472 = arith.constant 0 : index
    %710 = vector.load %arg2[%709, %c0_472] : memref<40x128xf32, #tpu.memory_space<vmem>>, vector<1x128xf32>
    %711 = arith.index_cast %c5_i32_467 : i32 to index
    %c0_473 = arith.constant 0 : index
    %712 = vector.load %arg8[%711, %c0_473] : memref<8x128xf32, #tpu.memory_space<vmem>>, vector<1x128xf32>
    tpu.vector_store %arg8[%711, %c0_473], %710 {strides = array<i32>} : memref<8x128xf32, #tpu.memory_space<vmem>>, vector<1x128xf32>,
    %c6_i32_474 = arith.constant 6 : i32
    %c8_i32_475 = arith.constant 8 : i32
    %713 = arith.muli %c6_i32_474, %c8_i32_475 : i32
    %714 = arith.addi %0, %713 : i32
    %c7_i32_476 = arith.constant 7 : i32
    %715 = arith.addi %714, %c7_i32_476 : i32
    %716 = arith.index_cast %715 : i32 to index
    %717 = memref.load %arg1[%716] : memref<64xi32, #tpu.memory_space<smem>>
    %c0_i32_477 = arith.constant 0 : i32
    %c39_i32_478 = arith.constant 39 : i32
    %718 = arith.maxsi %c0_i32_477, %717 : i32
    %719 = arith.minsi %c39_i32_478, %718 : i32
    %720 = arith.index_cast %719 : i32 to index
    %c0_479 = arith.constant 0 : index
    %721 = vector.load %arg2[%720, %c0_479] : memref<40x128xf32, #tpu.memory_space<vmem>>, vector<1x128xf32>
    %722 = arith.index_cast %c6_i32_474 : i32 to index
    %c0_480 = arith.constant 0 : index
    %723 = vector.load %arg8[%722, %c0_480] : memref<8x128xf32, #tpu.memory_space<vmem>>, vector<1x128xf32>
    tpu.vector_store %arg8[%722, %c0_480], %721 {strides = array<i32>} : memref<8x128xf32, #tpu.memory_space<vmem>>, vector<1x128xf32>,
    %c7_i32_481 = arith.constant 7 : i32
    %c8_i32_482 = arith.constant 8 : i32
    %724 = arith.muli %c7_i32_481, %c8_i32_482 : i32
    %725 = arith.addi %0, %724 : i32
    %c7_i32_483 = arith.constant 7 : i32
    %726 = arith.addi %725, %c7_i32_483 : i32
    %727 = arith.index_cast %726 : i32 to index
    %728 = memref.load %arg1[%727] : memref<64xi32, #tpu.memory_space<smem>>
    %c0_i32_484 = arith.constant 0 : i32
    %c39_i32_485 = arith.constant 39 : i32
    %729 = arith.maxsi %c0_i32_484, %728 : i32
    %730 = arith.minsi %c39_i32_485, %729 : i32
    %731 = arith.index_cast %730 : i32 to index
    %c0_486 = arith.constant 0 : index
    %732 = vector.load %arg2[%731, %c0_486] : memref<40x128xf32, #tpu.memory_space<vmem>>, vector<1x128xf32>
    %733 = arith.index_cast %c7_i32_481 : i32 to index
    %c0_487 = arith.constant 0 : index
    %734 = vector.load %arg8[%733, %c0_487] : memref<8x128xf32, #tpu.memory_space<vmem>>, vector<1x128xf32>
    tpu.vector_store %arg8[%733, %c0_487], %732 {strides = array<i32>} : memref<8x128xf32, #tpu.memory_space<vmem>>, vector<1x128xf32>,
    %c8_i32_488 = arith.constant 8 : i32
    %c0_489 = arith.constant 0 : index
    %c0_490 = arith.constant 0 : index
    %735 = vector.load %arg9[%c0_489, %c0_490] : memref<8x128xf32, #tpu.memory_space<vmem>>, vector<8x128xf32>
    %c0_491 = arith.constant 0 : index
    %c0_492 = arith.constant 0 : index
    %736 = vector.load %arg8[%c0_491, %c0_492] : memref<8x128xf32, #tpu.memory_space<vmem>>, vector<8x128xf32>
    %737 = arith.addf %735, %736 : vector<8x128xf32>
    %c0_493 = arith.constant 0 : index
    %c0_494 = arith.constant 0 : index
    %738 = vector.load %arg9[%c0_493, %c0_494] : memref<8x128xf32, #tpu.memory_space<vmem>>, vector<8x128xf32>
    tpu.vector_store %arg9[%c0_493, %c0_494], %737 {strides = array<i32>} : memref<8x128xf32, #tpu.memory_space<vmem>>, vector<8x128xf32>,
    %c0_495 = arith.constant 0 : index
    %c0_496 = arith.constant 0 : index
    %739 = vector.load %arg9[%c0_495, %c0_496] : memref<8x128xf32, #tpu.memory_space<vmem>>, vector<8x128xf32>
    %740 = arith.truncf %739 : vector<8x128xf32> to vector<8x128xbf16>
    %c0_497 = arith.constant 0 : index
    %c0_498 = arith.constant 0 : index
    %741 = vector.load %arg3[%c0_497, %c0_498] : memref<128x128xbf16, #tpu.memory_space<vmem>>, vector<128x128xbf16>
    %cst_499 = arith.constant dense<0.000000e+00> : vector<8x128xf32>
    %742 = tpu.matmul %740, %741, %cst_499 {dimension_numbers = #tpu.dot_dimension_numbers<[1], [0], [0], [1], [0, 0, 1, 1], [], []>} : vector<8x128xbf16>, vector<128x128xbf16>, vector<8x128xf32> -> vector<8x128xf32>
    %c0_500 = arith.constant 0 : index
    %c0_501 = arith.constant 0 : index
    %743 = vector.load %arg4[%c0_500, %c0_501] : memref<1x128xf32, #tpu.memory_space<vmem>>, vector<1x128xf32>
    %744 = vector.broadcast %743 : vector<1x128xf32> to vector<8x128xf32>
    %745 = arith.addf %742, %744 : vector<8x128xf32>
    %cst_502 = arith.constant 0.000000e+00 : f32
    %746 = vector.broadcast %cst_502 : f32 to vector<8x128xf32>
    %747 = arith.maximumf %745, %746 : vector<8x128xf32>
    %748 = arith.truncf %747 : vector<8x128xf32> to vector<8x128xbf16>
    %c0_503 = arith.constant 0 : index
    %c0_504 = arith.constant 0 : index
    %749 = vector.load %arg5[%c0_503, %c0_504] : memref<128x128xbf16, #tpu.memory_space<vmem>>, vector<128x128xbf16>
    %cst_505 = arith.constant dense<0.000000e+00> : vector<8x128xf32>
    %750 = tpu.matmul %748, %749, %cst_505 {dimension_numbers = #tpu.dot_dimension_numbers<[1], [0], [0], [1], [0, 0, 1, 1], [], []>} : vector<8x128xbf16>, vector<128x128xbf16>, vector<8x128xf32> -> vector<8x128xf32>
    %c0_506 = arith.constant 0 : index
    %c0_507 = arith.constant 0 : index
    %751 = vector.load %arg6[%c0_506, %c0_507] : memref<1x128xf32, #tpu.memory_space<vmem>>, vector<1x128xf32>
    %752 = vector.broadcast %751 : vector<1x128xf32> to vector<8x128xf32>
    %753 = arith.addf %750, %752 : vector<8x128xf32>
    %c0_508 = arith.constant 0 : index
    %c0_509 = arith.constant 0 : index
    %754 = vector.load %arg7[%c0_508, %c0_509] : memref<8x128xf32, #tpu.memory_space<vmem>>, vector<8x128xf32>
    tpu.vector_store %arg7[%c0_508, %c0_509], %753 {strides = array<i32>} : memref<8x128xf32, #tpu.memory_space<vmem>>, vector<8x128xf32>,
    return
  }
  func.func @transform_0(%arg0: i32, %arg1: memref<64xi32, #tpu.memory_space<smem>>) -> (i32, i32) {
    %c0_i32 = arith.constant 0 : i32
    %c0_i32_0 = arith.constant 0 : i32
    %c0_i32_1 = arith.constant 0 : i32
    return %c0_i32, %c0_i32_0 : i32, i32
  }
  func.func @transform_1(%arg0: i32, %arg1: memref<64xi32, #tpu.memory_space<smem>>) -> (i32, i32) {
    %c0_i32 = arith.constant 0 : i32
    %c0_i32_0 = arith.constant 0 : i32
    %c0_i32_1 = arith.constant 0 : i32
    return %c0_i32, %c0_i32_0 : i32, i32
  }
  func.func @transform_2(%arg0: i32, %arg1: memref<64xi32, #tpu.memory_space<smem>>) -> (i32, i32) {
    %c0_i32 = arith.constant 0 : i32
    %c0_i32_0 = arith.constant 0 : i32
    %c0_i32_1 = arith.constant 0 : i32
    return %c0_i32, %c0_i32_0 : i32, i32
  }
  func.func @transform_3(%arg0: i32, %arg1: memref<64xi32, #tpu.memory_space<smem>>) -> (i32, i32) {
    %c0_i32 = arith.constant 0 : i32
    %c0_i32_0 = arith.constant 0 : i32
    %c0_i32_1 = arith.constant 0 : i32
    return %c0_i32, %c0_i32_0 : i32, i32
  }
  func.func @transform_4(%arg0: i32, %arg1: memref<64xi32, #tpu.memory_space<smem>>) -> (i32, i32) {
    %c0_i32 = arith.constant 0 : i32
    %c0_i32_0 = arith.constant 0 : i32
    %c0_i32_1 = arith.constant 0 : i32
    return %c0_i32, %c0_i32_0 : i32, i32
  }
  func.func @transform_5(%arg0: i32, %arg1: memref<64xi32, #tpu.memory_space<smem>>) -> (i32, i32) {
    %c0_i32 = arith.constant 0 : i32
    %c0_i32_0 = arith.constant 0 : i32
    return %arg0, %c0_i32 : i32, i32
  }
}

</mosaic_0001>

<llo_original>
// kernel: tpu_custom_call.1
$region0: #{tpu_custom_call.1}
  #allocation0 [shape = 'u32[]', space=smem, size = 0x4, offset = 0x4, fixed_abs, tag = 'smem constant byte address 0x4 - core index']
  #allocation1 [shape = 'u32[144,128]{1,0:T(1,128)}', space=vmem, size = 0x12000, scoped, tag = 'internal scratch']
  #allocation2 [shape = 'f32[8,128]{1,0:T(8,128)}', space=vmem, size = 0x1000, scoped, tag = 'scratch operand']
  #allocation3 [shape = 'f32[8,128]{1,0:T(8,128)}', space=vmem, size = 0x1000, scoped, tag = 'scratch operand']
  #allocation4 [shape = 's32[1]{0}', space=sflag, size = 0x4, scoped, tag = 'scoped memory for tpu_custom_call.1']
  #allocation5 [shape = 'u8[512]{0}', space=smem, size = 0x200, scoped, tag = 'prefetched SMEM operand 0']
  %s0 = inlined_call_operand.hbm [shape: s32[64], index: 0, kind: input, shape index: {}]
  %s1 = inlined_call_operand.hbm [shape: f32[40,128], index: 1, kind: input, shape index: {}]
  %s2 = inlined_call_operand.hbm [shape: bf16[128,128], index: 2, kind: input, shape index: {}]
  %s3 = inlined_call_operand.vmem [shape: f32[1,128], index: 3, kind: input, shape index: {}]
  %s4 = inlined_call_operand.hbm [shape: bf16[128,128], index: 4, kind: input, shape index: {}]
  %s5 = inlined_call_operand.vmem [shape: f32[1,128], index: 5, kind: input, shape index: {}]
  %s6 = inlined_call_operand.hbm [shape: f32[8,128], index: 6, kind: output, shape index: {}]
  %s7 = sld [smem:[#allocation0]]
  $region42: #{tpu_custom_call.1} parent=0
    _
  %s9 = ssub.s32 1, %s7
  %s10 = scalar_select 0, %s9, %s7
  %12 = dma.hbm_to_smem %s0, 16, [#allocation5], [#allocation4]
  %13 = dma.done [#allocation4], 16
  %14 = sfence
  $region1: #{tpu_custom_call.1} parent=0
    #allocation6 [shape = 'u8[20480]{0}', space=vmem, size = 0x5000, scoped, tag = 'input window, operand 1, single buffered']
    #allocation7 [shape = 's32[1]{0}', space=sflag, size = 0x4, scoped, tag = 'scoped memory for tpu_custom_call.1']
    #allocation8 [shape = 's32[1]{0}', space=sflag, size = 0x4, scoped, tag = 'scoped memory for tpu_custom_call.1']
    #allocation9 [shape = 'u8[32768]{0}', space=vmem, size = 0x8000, scoped, tag = 'input window, operand 2, single buffered']
    #allocation10 [shape = 's32[1]{0}', space=sflag, size = 0x4, scoped, tag = 'scoped memory for tpu_custom_call.1']
    #allocation11 [shape = 'u8[32768]{0}', space=vmem, size = 0x8000, scoped, tag = 'input window, operand 4, single buffered']
    #allocation12 [shape = 'u8[4096]{0}', space=vmem, size = 0x1000, scoped, tag = 'output window, operand 0, single buffered']
    %15 = vsyncpa [#allocation7], 0
    %16 = vsyncpa [#allocation10], 0
    %17 = vsyncpa [#allocation8], 0
    // Predicated region
    $region2: #{tpu_custom_call.1} parent=1 // pred_check
      _
    $region3: #{tpu_custom_call.1} parent=1 // pred_check_branch
      %19 = sbr.rel (0) target = $region5
    $region4: #{tpu_custom_call.1} parent=1 // pred_region
      %s21 = ssub.s32 640, 640
      %22 = vsyncadd [#allocation7], %s21
      %s23 = sshll.u32 [#allocation6], 4
      %s24 = int_to_ptr.vmem [resolvable:$true] %s23
      %29 = dma.hbm_to_vmem [thread:$0]  %s1, 640, %s24, [#allocation7], 128, 128, 8
    $region5: #{tpu_custom_call.1} parent=1 // pred_fallthru
      _
    // Predicated region
    $region6: #{tpu_custom_call.1} parent=1 // pred_check
      _
    $region7: #{tpu_custom_call.1} parent=1 // pred_check_branch
      %31 = sbr.rel (0) target = $region9
    $region8: #{tpu_custom_call.1} parent=1 // pred_region
      %s33 = ssub.s32 1024, 1024
      %34 = vsyncadd [#allocation10], %s33
      %s35 = sshll.u32 [#allocation9], 4
      %s36 = int_to_ptr.vmem [resolvable:$true] %s35
      %41 = dma.hbm_to_vmem [thread:$0]  %s2, 1024, %s36, [#allocation10], 64, 64, 4
    $region9: #{tpu_custom_call.1} parent=1 // pred_fallthru
      _
    // Predicated region
    $region10: #{tpu_custom_call.1} parent=1 // pred_check
      _
    $region11: #{tpu_custom_call.1} parent=1 // pred_check_branch
      %43 = sbr.rel (0) target = $region13
    $region12: #{tpu_custom_call.1} parent=1 // pred_region
      _
    $region13: #{tpu_custom_call.1} parent=1 // pred_fallthru
      _
    // Predicated region
    $region14: #{tpu_custom_call.1} parent=1 // pred_check
      _
    $region15: #{tpu_custom_call.1} parent=1 // pred_check_branch
      %45 = sbr.rel (0) target = $region17
    $region16: #{tpu_custom_call.1} parent=1 // pred_region
      %s47 = ssub.s32 1024, 1024
      %48 = vsyncadd [#allocation10], %s47
      %s49 = sshll.u32 [#allocation11], 4
      %s50 = int_to_ptr.vmem [resolvable:$true] %s49
      %55 = dma.hbm_to_vmem [thread:$0]  %s4, 1024, %s50, [#allocation10], 64, 64, 4
    $region17: #{tpu_custom_call.1} parent=1 // pred_fallthru
      _
    // Predicated region
    $region18: #{tpu_custom_call.1} parent=1 // pred_check
      _
    $region19: #{tpu_custom_call.1} parent=1 // pred_check_branch
      %57 = sbr.rel (0) target = $region21
    $region20: #{tpu_custom_call.1} parent=1 // pred_region
      _
    $region21: #{tpu_custom_call.1} parent=1 // pred_fallthru
      _
    // Predicated region
    $region22: #{tpu_custom_call.1} parent=1 // pred_check
      _
    $region23: #{tpu_custom_call.1} parent=1 // pred_check_branch
      %59 = sbr.rel (0) target = $region25
    $region24: #{tpu_custom_call.1} parent=1 // pred_region
      %60 = dma.done [#allocation7], 640
    $region25: #{tpu_custom_call.1} parent=1 // pred_fallthru
      _
    // Predicated region
    $region26: #{tpu_custom_call.1} parent=1 // pred_check
      _
    $region27: #{tpu_custom_call.1} parent=1 // pred_check_branch
      %62 = sbr.rel (0) target = $region29
    $region28: #{tpu_custom_call.1} parent=1 // pred_region
      %63 = dma.done [#allocation10], 1024
    $region29: #{tpu_custom_call.1} parent=1 // pred_fallthru
      _
    // Predicated region
    $region30: #{tpu_custom_call.1} parent=1 // pred_check
      _
    $region31: #{tpu_custom_call.1} parent=1 // pred_check_branch
      %65 = sbr.rel (0) target = $region33
    $region32: #{tpu_custom_call.1} parent=1 // pred_region
      %66 = dma.done [#allocation10], 1024
    $region33: #{tpu_custom_call.1} parent=1 // pred_fallthru
      _
    %s68 = smul.u32 0, 64
    %69 = vst [vmem:[#allocation3] sm:$0xff] 0.0
    %s70 = sld [smem:[#allocation5 + %s68]]
    %p71 = scmp.gt.s32.totalorder %s70, 0
    %s72 = scalar_select %p71, %s70, 0
    %p73 = scmp.lt.s32.totalorder %s72, 39
    %s74 = scalar_select %p73, %s72, 39
    %s75 = scalar_lea.vmem [#allocation6], %s74
    %v76 = vld [vmem:[%s75] sm:$0x1]
    %77 = vst [vmem:[#allocation2] sm:$0x1] %v76
    %s78 = sadd.s32 %s68, 8
    %s79 = sld [smem:[#allocation5 + %s78]]
    %p80 = scmp.gt.s32.totalorder %s79, 0
    %s81 = scalar_select %p80, %s79, 0
    %p82 = scmp.lt.s32.totalorder %s81, 39
    %s83 = scalar_select %p82, %s81, 39
    %s84 = scalar_lea.vmem [#allocation6], %s83
    %v85 = vld [vmem:[%s84] sm:$0x1]
    %86 = vst [vmem:[#allocation2 + $0x1] sm:$0x1] %v85
    %s87 = sadd.s32 %s68, 16
    %s88 = sld [smem:[#allocation5 + %s87]]
    %p89 = scmp.gt.s32.totalorder %s88, 0
    %s90 = scalar_select %p89, %s88, 0
    %p91 = scmp.lt.s32.totalorder %s90, 39
    %s92 = scalar_select %p91, %s90, 39
    %s93 = scalar_lea.vmem [#allocation6], %s92
    %v94 = vld [vmem:[%s93] sm:$0x1]
    %95 = vst [vmem:[#allocation2 + $0x2] sm:$0x1] %v94
    %s96 = sadd.s32 %s68, 24
    %s97 = sld [smem:[#allocation5 + %s96]]
    %p98 = scmp.gt.s32.totalorder %s97, 0
    %s99 = scalar_select %p98, %s97, 0
    %p100 = scmp.lt.s32.totalorder %s99, 39
    %s101 = scalar_select %p100, %s99, 39
    %s102 = scalar_lea.vmem [#allocation6], %s101
    %v103 = vld [vmem:[%s102] sm:$0x1]
    %104 = vst [vmem:[#allocation2 + $0x3] sm:$0x1] %v103
    %s105 = sadd.s32 %s68, 32
    %s106 = sld [smem:[#allocation5 + %s105]]
    %p107 = scmp.gt.s32.totalorder %s106, 0
    %s108 = scalar_select %p107, %s106, 0
    %p109 = scmp.lt.s32.totalorder %s108, 39
    %s110 = scalar_select %p109, %s108, 39
    %s111 = scalar_lea.vmem [#allocation6], %s110
    %v112 = vld [vmem:[%s111] sm:$0x1]
    %113 = vst [vmem:[#allocation2 + $0x4] sm:$0x1] %v112
    %s114 = sadd.s32 %s68, 40
    %s115 = sld [smem:[#allocation5 + %s114]]
    %p116 = scmp.gt.s32.totalorder %s115, 0
    %s117 = scalar_select %p116, %s115, 0
    %p118 = scmp.lt.s32.totalorder %s117, 39
    %s119 = scalar_select %p118, %s117, 39
    %s120 = scalar_lea.vmem [#allocation6], %s119
    %v121 = vld [vmem:[%s120] sm:$0x1]
    %122 = vst [vmem:[#allocation2 + $0x5] sm:$0x1] %v121
    %s123 = sadd.s32 %s68, 48
    %s124 = sld [smem:[#allocation5 + %s123]]
    %p125 = scmp.gt.s32.totalorder %s124, 0
    %s126 = scalar_select %p125, %s124, 0
    %p127 = scmp.lt.s32.totalorder %s126, 39
    %s128 = scalar_select %p127, %s126, 39
    %s129 = scalar_lea.vmem [#allocation6], %s128
    %v130 = vld [vmem:[%s129] sm:$0x1]
    %131 = vst [vmem:[#allocation2 + $0x6] sm:$0x1] %v130
    %s132 = sadd.s32 %s68, 56
    %s133 = sld [smem:[#allocation5 + %s132]]
    %p134 = scmp.gt.s32.totalorder %s133, 0
    %s135 = scalar_select %p134, %s133, 0
    %p136 = scmp.lt.s32.totalorder %s135, 39
    %s137 = scalar_select %p136, %s135, 39
    %s138 = scalar_lea.vmem [#allocation6], %s137
    %v139 = vld [vmem:[%s138] sm:$0x1]
    %140 = vst [vmem:[#allocation2 + $0x7] sm:$0x1] %v139
    %v141 = vld [vmem:[#allocation3] sm:$0xff]
    %v142 = vld [vmem:[#allocation2] sm:$0xff]
    %v143 = vadd.f32 %v141, %v142
    %144 = vst [vmem:[#allocation3] sm:$0xff] %v143
    %s145 = sadd.s32 %s68, 1
    %s146 = sld [smem:[#allocation5 + %s145]]
    %p147 = scmp.gt.s32.totalorder %s146, 0
    %s148 = scalar_select %p147, %s146, 0
    %p149 = scmp.lt.s32.totalorder %s148, 39
    %s150 = scalar_select %p149, %s148, 39
    %s151 = scalar_lea.vmem [#allocation6], %s150
    %v152 = vld [vmem:[%s151] sm:$0x1]
    %153 = vst [vmem:[#allocation2] sm:$0x1] %v152
    %s154 = sadd.s32 %s68, 9
    %s155 = sld [smem:[#allocation5 + %s154]]
    %p156 = scmp.gt.s32.totalorder %s155, 0
    %s157 = scalar_select %p156, %s155, 0
    %p158 = scmp.lt.s32.totalorder %s157, 39
    %s159 = scalar_select %p158, %s157, 39
    %s160 = scalar_lea.vmem [#allocation6], %s159
    %v161 = vld [vmem:[%s160] sm:$0x1]
    %162 = vst [vmem:[#allocation2 + $0x1] sm:$0x1] %v161
    %s163 = sadd.s32 %s68, 17
    %s164 = sld [smem:[#allocation5 + %s163]]
    %p165 = scmp.gt.s32.totalorder %s164, 0
    %s166 = scalar_select %p165, %s164, 0
    %p167 = scmp.lt.s32.totalorder %s166, 39
    %s168 = scalar_select %p167, %s166, 39
    %s169 = scalar_lea.vmem [#allocation6], %s168
    %v170 = vld [vmem:[%s169] sm:$0x1]
    %171 = vst [vmem:[#allocation2 + $0x2] sm:$0x1] %v170
    %s172 = sadd.s32 %s68, 25
    %s173 = sld [smem:[#allocation5 + %s172]]
    %p174 = scmp.gt.s32.totalorder %s173, 0
    %s175 = scalar_select %p174, %s173, 0
    %p176 = scmp.lt.s32.totalorder %s175, 39
    %s177 = scalar_select %p176, %s175, 39
    %s178 = scalar_lea.vmem [#allocation6], %s177
    %v179 = vld [vmem:[%s178] sm:$0x1]
    %180 = vst [vmem:[#allocation2 + $0x3] sm:$0x1] %v179
    %s181 = sadd.s32 %s68, 33
    %s182 = sld [smem:[#allocation5 + %s181]]
    %p183 = scmp.gt.s32.totalorder %s182, 0
    %s184 = scalar_select %p183, %s182, 0
    %p185 = scmp.lt.s32.totalorder %s184, 39
    %s186 = scalar_select %p185, %s184, 39
    %s187 = scalar_lea.vmem [#allocation6], %s186
    %v188 = vld [vmem:[%s187] sm:$0x1]
    %189 = vst [vmem:[#allocation2 + $0x4] sm:$0x1] %v188
    %s190 = sadd.s32 %s68, 41
    %s191 = sld [smem:[#allocation5 + %s190]]
    %p192 = scmp.gt.s32.totalorder %s191, 0
    %s193 = scalar_select %p192, %s191, 0
    %p194 = scmp.lt.s32.totalorder %s193, 39
    %s195 = scalar_select %p194, %s193, 39
    %s196 = scalar_lea.vmem [#allocation6], %s195
    %v197 = vld [vmem:[%s196] sm:$0x1]
    %198 = vst [vmem:[#allocation2 + $0x5] sm:$0x1] %v197
    %s199 = sadd.s32 %s68, 49
    %s200 = sld [smem:[#allocation5 + %s199]]
    %p201 = scmp.gt.s32.totalorder %s200, 0
    %s202 = scalar_select %p201, %s200, 0
    %p203 = scmp.lt.s32.totalorder %s202, 39
    %s204 = scalar_select %p203, %s202, 39
    %s205 = scalar_lea.vmem [#allocation6], %s204
    %v206 = vld [vmem:[%s205] sm:$0x1]
    %207 = vst [vmem:[#allocation2 + $0x6] sm:$0x1] %v206
    %s208 = sadd.s32 %s68, 57
    %s209 = sld [smem:[#allocation5 + %s208]]
    %p210 = scmp.gt.s32.totalorder %s209, 0
    %s211 = scalar_select %p210, %s209, 0
    %p212 = scmp.lt.s32.totalorder %s211, 39
    %s213 = scalar_select %p212, %s211, 39
    %s214 = scalar_lea.vmem [#allocation6], %s213
    %v215 = vld [vmem:[%s214] sm:$0x1]
    %216 = vst [vmem:[#allocation2 + $0x7] sm:$0x1] %v215
    %v217 = vld [vmem:[#allocation3] sm:$0xff]
    %v218 = vld [vmem:[#allocation2] sm:$0xff]
    %v219 = vadd.f32 %v217, %v218
    %220 = vst [vmem:[#allocation3] sm:$0xff] %v219
    %s221 = sadd.s32 %s68, 2
    %s222 = sld [smem:[#allocation5 + %s221]]
    %p223 = scmp.gt.s32.totalorder %s222, 0
    %s224 = scalar_select %p223, %s222, 0
    %p225 = scmp.lt.s32.totalorder %s224, 39
    %s226 = scalar_select %p225, %s224, 39
    %s227 = scalar_lea.vmem [#allocation6], %s226
    %v228 = vld [vmem:[%s227] sm:$0x1]
    %229 = vst [vmem:[#allocation2] sm:$0x1] %v228
    %s230 = sadd.s32 %s68, 10
    %s231 = sld [smem:[#allocation5 + %s230]]
    %p232 = scmp.gt.s32.totalorder %s231, 0
    %s233 = scalar_select %p232, %s231, 0
    %p234 = scmp.lt.s32.totalorder %s233, 39
    %s235 = scalar_select %p234, %s233, 39
    %s236 = scalar_lea.vmem [#allocation6], %s235
    %v237 = vld [vmem:[%s236] sm:$0x1]
    %238 = vst [vmem:[#allocation2 + $0x1] sm:$0x1] %v237
    %s239 = sadd.s32 %s68, 18
    %s240 = sld [smem:[#allocation5 + %s239]]
    %p241 = scmp.gt.s32.totalorder %s240, 0
    %s242 = scalar_select %p241, %s240, 0
    %p243 = scmp.lt.s32.totalorder %s242, 39
    %s244 = scalar_select %p243, %s242, 39
    %s245 = scalar_lea.vmem [#allocation6], %s244
    %v246 = vld [vmem:[%s245] sm:$0x1]
    %247 = vst [vmem:[#allocation2 + $0x2] sm:$0x1] %v246
    %s248 = sadd.s32 %s68, 26
    %s249 = sld [smem:[#allocation5 + %s248]]
    %p250 = scmp.gt.s32.totalorder %s249, 0
    %s251 = scalar_select %p250, %s249, 0
    %p252 = scmp.lt.s32.totalorder %s251, 39
    %s253 = scalar_select %p252, %s251, 39
    %s254 = scalar_lea.vmem [#allocation6], %s253
    %v255 = vld [vmem:[%s254] sm:$0x1]
    %256 = vst [vmem:[#allocation2 + $0x3] sm:$0x1] %v255
    %s257 = sadd.s32 %s68, 34
    %s258 = sld [smem:[#allocation5 + %s257]]
    %p259 = scmp.gt.s32.totalorder %s258, 0
    %s260 = scalar_select %p259, %s258, 0
    %p261 = scmp.lt.s32.totalorder %s260, 39
    %s262 = scalar_select %p261, %s260, 39
    %s263 = scalar_lea.vmem [#allocation6], %s262
    %v264 = vld [vmem:[%s263] sm:$0x1]
    %265 = vst [vmem:[#allocation2 + $0x4] sm:$0x1] %v264
    %s266 = sadd.s32 %s68, 42
    %s267 = sld [smem:[#allocation5 + %s266]]
    %p268 = scmp.gt.s32.totalorder %s267, 0
    %s269 = scalar_select %p268, %s267, 0
    %p270 = scmp.lt.s32.totalorder %s269, 39
    %s271 = scalar_select %p270, %s269, 39
    %s272 = scalar_lea.vmem [#allocation6], %s271
    %v273 = vld [vmem:[%s272] sm:$0x1]
    %274 = vst [vmem:[#allocation2 + $0x5] sm:$0x1] %v273
    %s275 = sadd.s32 %s68, 50
    %s276 = sld [smem:[#allocation5 + %s275]]
    %p277 = scmp.gt.s32.totalorder %s276, 0
    %s278 = scalar_select %p277, %s276, 0
    %p279 = scmp.lt.s32.totalorder %s278, 39
    %s280 = scalar_select %p279, %s278, 39
    %s281 = scalar_lea.vmem [#allocation6], %s280
    %v282 = vld [vmem:[%s281] sm:$0x1]
    %283 = vst [vmem:[#allocation2 + $0x6] sm:$0x1] %v282
    %s284 = sadd.s32 %s68, 58
    %s285 = sld [smem:[#allocation5 + %s284]]
    %p286 = scmp.gt.s32.totalorder %s285, 0
    %s287 = scalar_select %p286, %s285, 0
    %p288 = scmp.lt.s32.totalorder %s287, 39
    %s289 = scalar_select %p288, %s287, 39
    %s290 = scalar_lea.vmem [#allocation6], %s289
    %v291 = vld [vmem:[%s290] sm:$0x1]
    %292 = vst [vmem:[#allocation2 + $0x7] sm:$0x1] %v291
    %v293 = vld [vmem:[#allocation3] sm:$0xff]
    %v294 = vld [vmem:[#allocation2] sm:$0xff]
    %v295 = vadd.f32 %v293, %v294
    %296 = vst [vmem:[#allocation3] sm:$0xff] %v295
    %s297 = sadd.s32 %s68, 3
    %s298 = sld [smem:[#allocation5 + %s297]]
    %p299 = scmp.gt.s32.totalorder %s298, 0
    %s300 = scalar_select %p299, %s298, 0
    %p301 = scmp.lt.s32.totalorder %s300, 39
    %s302 = scalar_select %p301, %s300, 39
    %s303 = scalar_lea.vmem [#allocation6], %s302
    %v304 = vld [vmem:[%s303] sm:$0x1]
    %305 = vst [vmem:[#allocation2] sm:$0x1] %v304
    %s306 = sadd.s32 %s68, 11
    %s307 = sld [smem:[#allocation5 + %s306]]
    %p308 = scmp.gt.s32.totalorder %s307, 0
    %s309 = scalar_select %p308, %s307, 0
    %p310 = scmp.lt.s32.totalorder %s309, 39
    %s311 = scalar_select %p310, %s309, 39
    %s312 = scalar_lea.vmem [#allocation6], %s311
    %v313 = vld [vmem:[%s312] sm:$0x1]
    %314 = vst [vmem:[#allocation2 + $0x1] sm:$0x1] %v313
    %s315 = sadd.s32 %s68, 19
    %s316 = sld [smem:[#allocation5 + %s315]]
    %p317 = scmp.gt.s32.totalorder %s316, 0
    %s318 = scalar_select %p317, %s316, 0
    %p319 = scmp.lt.s32.totalorder %s318, 39
    %s320 = scalar_select %p319, %s318, 39
    %s321 = scalar_lea.vmem [#allocation6], %s320
    %v322 = vld [vmem:[%s321] sm:$0x1]
    %323 = vst [vmem:[#allocation2 + $0x2] sm:$0x1] %v322
    %s324 = sadd.s32 %s68, 27
    %s325 = sld [smem:[#allocation5 + %s324]]
    %p326 = scmp.gt.s32.totalorder %s325, 0
    %s327 = scalar_select %p326, %s325, 0
    %p328 = scmp.lt.s32.totalorder %s327, 39
    %s329 = scalar_select %p328, %s327, 39
    %s330 = scalar_lea.vmem [#allocation6], %s329
    %v331 = vld [vmem:[%s330] sm:$0x1]
    %332 = vst [vmem:[#allocation2 + $0x3] sm:$0x1] %v331
    %s333 = sadd.s32 %s68, 35
    %s334 = sld [smem:[#allocation5 + %s333]]
    %p335 = scmp.gt.s32.totalorder %s334, 0
    %s336 = scalar_select %p335, %s334, 0
    %p337 = scmp.lt.s32.totalorder %s336, 39
    %s338 = scalar_select %p337, %s336, 39
    %s339 = scalar_lea.vmem [#allocation6], %s338
    %v340 = vld [vmem:[%s339] sm:$0x1]
    %341 = vst [vmem:[#allocation2 + $0x4] sm:$0x1] %v340
    %s342 = sadd.s32 %s68, 43
    %s343 = sld [smem:[#allocation5 + %s342]]
    %p344 = scmp.gt.s32.totalorder %s343, 0
    %s345 = scalar_select %p344, %s343, 0
    %p346 = scmp.lt.s32.totalorder %s345, 39
    %s347 = scalar_select %p346, %s345, 39
    %s348 = scalar_lea.vmem [#allocation6], %s347
    %v349 = vld [vmem:[%s348] sm:$0x1]
    %350 = vst [vmem:[#allocation2 + $0x5] sm:$0x1] %v349
    %s351 = sadd.s32 %s68, 51
    %s352 = sld [smem:[#allocation5 + %s351]]
    %p353 = scmp.gt.s32.totalorder %s352, 0
    %s354 = scalar_select %p353, %s352, 0
    %p355 = scmp.lt.s32.totalorder %s354, 39
    %s356 = scalar_select %p355, %s354, 39
    %s357 = scalar_lea.vmem [#allocation6], %s356
    %v358 = vld [vmem:[%s357] sm:$0x1]
    %359 = vst [vmem:[#allocation2 + $0x6] sm:$0x1] %v358
    %s360 = sadd.s32 %s68, 59
    %s361 = sld [smem:[#allocation5 + %s360]]
    %p362 = scmp.gt.s32.totalorder %s361, 0
    %s363 = scalar_select %p362, %s361, 0
    %p364 = scmp.lt.s32.totalorder %s363, 39
    %s365 = scalar_select %p364, %s363, 39
    %s366 = scalar_lea.vmem [#allocation6], %s365
    %v367 = vld [vmem:[%s366] sm:$0x1]
    %368 = vst [vmem:[#allocation2 + $0x7] sm:$0x1] %v367
    %v369 = vld [vmem:[#allocation3] sm:$0xff]
    %v370 = vld [vmem:[#allocation2] sm:$0xff]
    %v371 = vadd.f32 %v369, %v370
    %372 = vst [vmem:[#allocation3] sm:$0xff] %v371
    %s373 = sadd.s32 %s68, 4
    %s374 = sld [smem:[#allocation5 + %s373]]
    %p375 = scmp.gt.s32.totalorder %s374, 0
    %s376 = scalar_select %p375, %s374, 0
    %p377 = scmp.lt.s32.totalorder %s376, 39
    %s378 = scalar_select %p377, %s376, 39
    %s379 = scalar_lea.vmem [#allocation6], %s378
    %v380 = vld [vmem:[%s379] sm:$0x1]
    %381 = vst [vmem:[#allocation2] sm:$0x1] %v380
    %s382 = sadd.s32 %s68, 12
    %s383 = sld [smem:[#allocation5 + %s382]]
    %p384 = scmp.gt.s32.totalorder %s383, 0
    %s385 = scalar_select %p384, %s383, 0
    %p386 = scmp.lt.s32.totalorder %s385, 39
    %s387 = scalar_select %p386, %s385, 39
    %s388 = scalar_lea.vmem [#allocation6], %s387
    %v389 = vld [vmem:[%s388] sm:$0x1]
    %390 = vst [vmem:[#allocation2 + $0x1] sm:$0x1] %v389
    %s391 = sadd.s32 %s68, 20
    %s392 = sld [smem:[#allocation5 + %s391]]
    %p393 = scmp.gt.s32.totalorder %s392, 0
    %s394 = scalar_select %p393, %s392, 0
    %p395 = scmp.lt.s32.totalorder %s394, 39
    %s396 = scalar_select %p395, %s394, 39
    %s397 = scalar_lea.vmem [#allocation6], %s396
    %v398 = vld [vmem:[%s397] sm:$0x1]
    %399 = vst [vmem:[#allocation2 + $0x2] sm:$0x1] %v398
    %s400 = sadd.s32 %s68, 28
    %s401 = sld [smem:[#allocation5 + %s400]]
    %p402 = scmp.gt.s32.totalorder %s401, 0
    %s403 = scalar_select %p402, %s401, 0
    %p404 = scmp.lt.s32.totalorder %s403, 39
    %s405 = scalar_select %p404, %s403, 39
    %s406 = scalar_lea.vmem [#allocation6], %s405
    %v407 = vld [vmem:[%s406] sm:$0x1]
    %408 = vst [vmem:[#allocation2 + $0x3] sm:$0x1] %v407
    %s409 = sadd.s32 %s68, 36
    %s410 = sld [smem:[#allocation5 + %s409]]
    %p411 = scmp.gt.s32.totalorder %s410, 0
    %s412 = scalar_select %p411, %s410, 0
    %p413 = scmp.lt.s32.totalorder %s412, 39
    %s414 = scalar_select %p413, %s412, 39
    %s415 = scalar_lea.vmem [#allocation6], %s414
    %v416 = vld [vmem:[%s415] sm:$0x1]
    %417 = vst [vmem:[#allocation2 + $0x4] sm:$0x1] %v416
    %s418 = sadd.s32 %s68, 44
    %s419 = sld [smem:[#allocation5 + %s418]]
    %p420 = scmp.gt.s32.totalorder %s419, 0
    %s421 = scalar_select %p420, %s419, 0
    %p422 = scmp.lt.s32.totalorder %s421, 39
    %s423 = scalar_select %p422, %s421, 39
    %s424 = scalar_lea.vmem [#allocation6], %s423
    %v425 = vld [vmem:[%s424] sm:$0x1]
    %426 = vst [vmem:[#allocation2 + $0x5] sm:$0x1] %v425
    %s427 = sadd.s32 %s68, 52
    %s428 = sld [smem:[#allocation5 + %s427]]
    %p429 = scmp.gt.s32.totalorder %s428, 0
    %s430 = scalar_select %p429, %s428, 0
    %p431 = scmp.lt.s32.totalorder %s430, 39
    %s432 = scalar_select %p431, %s430, 39
    %s433 = scalar_lea.vmem [#allocation6], %s432
    %v434 = vld [vmem:[%s433] sm:$0x1]
    %435 = vst [vmem:[#allocation2 + $0x6] sm:$0x1] %v434
    %s436 = sadd.s32 %s68, 60
    %s437 = sld [smem:[#allocation5 + %s436]]
    %p438 = scmp.gt.s32.totalorder %s437, 0
    %s439 = scalar_select %p438, %s437, 0
    %p440 = scmp.lt.s32.totalorder %s439, 39
    %s441 = scalar_select %p440, %s439, 39
    %s442 = scalar_lea.vmem [#allocation6], %s441
    %v443 = vld [vmem:[%s442] sm:$0x1]
    %444 = vst [vmem:[#allocation2 + $0x7] sm:$0x1] %v443
    %v445 = vld [vmem:[#allocation3] sm:$0xff]
    %v446 = vld [vmem:[#allocation2] sm:$0xff]
    %v447 = vadd.f32 %v445, %v446
    %448 = vst [vmem:[#allocation3] sm:$0xff] %v447
    %s449 = sadd.s32 %s68, 5
    %s450 = sld [smem:[#allocation5 + %s449]]
    %p451 = scmp.gt.s32.totalorder %s450, 0
    %s452 = scalar_select %p451, %s450, 0
    %p453 = scmp.lt.s32.totalorder %s452, 39
    %s454 = scalar_select %p453, %s452, 39
    %s455 = scalar_lea.vmem [#allocation6], %s454
    %v456 = vld [vmem:[%s455] sm:$0x1]
    %457 = vst [vmem:[#allocation2] sm:$0x1] %v456
    %s458 = sadd.s32 %s68, 13
    %s459 = sld [smem:[#allocation5 + %s458]]
    %p460 = scmp.gt.s32.totalorder %s459, 0
    %s461 = scalar_select %p460, %s459, 0
    %p462 = scmp.lt.s32.totalorder %s461, 39
    %s463 = scalar_select %p462, %s461, 39
    %s464 = scalar_lea.vmem [#allocation6], %s463
    %v465 = vld [vmem:[%s464] sm:$0x1]
    %466 = vst [vmem:[#allocation2 + $0x1] sm:$0x1] %v465
    %s467 = sadd.s32 %s68, 21
    %s468 = sld [smem:[#allocation5 + %s467]]
    %p469 = scmp.gt.s32.totalorder %s468, 0
    %s470 = scalar_select %p469, %s468, 0
    %p471 = scmp.lt.s32.totalorder %s470, 39
    %s472 = scalar_select %p471, %s470, 39
    %s473 = scalar_lea.vmem [#allocation6], %s472
    %v474 = vld [vmem:[%s473] sm:$0x1]
    %475 = vst [vmem:[#allocation2 + $0x2] sm:$0x1] %v474
    %s476 = sadd.s32 %s68, 29
    %s477 = sld [smem:[#allocation5 + %s476]]
    %p478 = scmp.gt.s32.totalorder %s477, 0
    %s479 = scalar_select %p478, %s477, 0
    %p480 = scmp.lt.s32.totalorder %s479, 39
    %s481 = scalar_select %p480, %s479, 39
    %s482 = scalar_lea.vmem [#allocation6], %s481
    %v483 = vld [vmem:[%s482] sm:$0x1]
    %484 = vst [vmem:[#allocation2 + $0x3] sm:$0x1] %v483
    %s485 = sadd.s32 %s68, 37
    %s486 = sld [smem:[#allocation5 + %s485]]
    %p487 = scmp.gt.s32.totalorder %s486, 0
    %s488 = scalar_select %p487, %s486, 0
    %p489 = scmp.lt.s32.totalorder %s488, 39
    %s490 = scalar_select %p489, %s488, 39
    %s491 = scalar_lea.vmem [#allocation6], %s490
    %v492 = vld [vmem:[%s491] sm:$0x1]
    %493 = vst [vmem:[#allocation2 + $0x4] sm:$0x1] %v492
    %s494 = sadd.s32 %s68, 45
    %s495 = sld [smem:[#allocation5 + %s494]]
    %p496 = scmp.gt.s32.totalorder %s495, 0
    %s497 = scalar_select %p496, %s495, 0
    %p498 = scmp.lt.s32.totalorder %s497, 39
    %s499 = scalar_select %p498, %s497, 39
    %s500 = scalar_lea.vmem [#allocation6], %s499
    %v501 = vld [vmem:[%s500] sm:$0x1]
    %502 = vst [vmem:[#allocation2 + $0x5] sm:$0x1] %v501
    %s503 = sadd.s32 %s68, 53
    %s504 = sld [smem:[#allocation5 + %s503]]
    %p505 = scmp.gt.s32.totalorder %s504, 0
    %s506 = scalar_select %p505, %s504, 0
    %p507 = scmp.lt.s32.totalorder %s506, 39
    %s508 = scalar_select %p507, %s506, 39
    %s509 = scalar_lea.vmem [#allocation6], %s508
    %v510 = vld [vmem:[%s509] sm:$0x1]
    %511 = vst [vmem:[#allocation2 + $0x6] sm:$0x1] %v510
    %s512 = sadd.s32 %s68, 61
    %s513 = sld [smem:[#allocation5 + %s512]]
    %p514 = scmp.gt.s32.totalorder %s513, 0
    %s515 = scalar_select %p514, %s513, 0
    %p516 = scmp.lt.s32.totalorder %s515, 39
    %s517 = scalar_select %p516, %s515, 39
    %s518 = scalar_lea.vmem [#allocation6], %s517
    %v519 = vld [vmem:[%s518] sm:$0x1]
    %520 = vst [vmem:[#allocation2 + $0x7] sm:$0x1] %v519
    %v521 = vld [vmem:[#allocation3] sm:$0xff]
    %v522 = vld [vmem:[#allocation2] sm:$0xff]
    %v523 = vadd.f32 %v521, %v522
    %524 = vst [vmem:[#allocation3] sm:$0xff] %v523
    %s525 = sadd.s32 %s68, 6
    %s526 = sld [smem:[#allocation5 + %s525]]
    %p527 = scmp.gt.s32.totalorder %s526, 0
    %s528 = scalar_select %p527, %s526, 0
    %p529 = scmp.lt.s32.totalorder %s528, 39
    %s530 = scalar_select %p529, %s528, 39
    %s531 = scalar_lea.vmem [#allocation6], %s530
    %v532 = vld [vmem:[%s531] sm:$0x1]
    %533 = vst [vmem:[#allocation2] sm:$0x1] %v532
    %s534 = sadd.s32 %s68, 14
    %s535 = sld [smem:[#allocation5 + %s534]]
    %p536 = scmp.gt.s32.totalorder %s535, 0
    %s537 = scalar_select %p536, %s535, 0
    %p538 = scmp.lt.s32.totalorder %s537, 39
    %s539 = scalar_select %p538, %s537, 39
    %s540 = scalar_lea.vmem [#allocation6], %s539
    %v541 = vld [vmem:[%s540] sm:$0x1]
    %542 = vst [vmem:[#allocation2 + $0x1] sm:$0x1] %v541
    %s543 = sadd.s32 %s68, 22
    %s544 = sld [smem:[#allocation5 + %s543]]
    %p545 = scmp.gt.s32.totalorder %s544, 0
    %s546 = scalar_select %p545, %s544, 0
    %p547 = scmp.lt.s32.totalorder %s546, 39
    %s548 = scalar_select %p547, %s546, 39
    %s549 = scalar_lea.vmem [#allocation6], %s548
    %v550 = vld [vmem:[%s549] sm:$0x1]
    %551 = vst [vmem:[#allocation2 + $0x2] sm:$0x1] %v550
    %s552 = sadd.s32 %s68, 30
    %s553 = sld [smem:[#allocation5 + %s552]]
    %p554 = scmp.gt.s32.totalorder %s553, 0
    %s555 = scalar_select %p554, %s553, 0
    %p556 = scmp.lt.s32.totalorder %s555, 39
    %s557 = scalar_select %p556, %s555, 39
    %s558 = scalar_lea.vmem [#allocation6], %s557
    %v559 = vld [vmem:[%s558] sm:$0x1]
    %560 = vst [vmem:[#allocation2 + $0x3] sm:$0x1] %v559
    %s561 = sadd.s32 %s68, 38
    %s562 = sld [smem:[#allocation5 + %s561]]
    %p563 = scmp.gt.s32.totalorder %s562, 0
    %s564 = scalar_select %p563, %s562, 0
    %p565 = scmp.lt.s32.totalorder %s564, 39
    %s566 = scalar_select %p565, %s564, 39
    %s567 = scalar_lea.vmem [#allocation6], %s566
    %v568 = vld [vmem:[%s567] sm:$0x1]
    %569 = vst [vmem:[#allocation2 + $0x4] sm:$0x1] %v568
    %s570 = sadd.s32 %s68, 46
    %s571 = sld [smem:[#allocation5 + %s570]]
    %p572 = scmp.gt.s32.totalorder %s571, 0
    %s573 = scalar_select %p572, %s571, 0
    %p574 = scmp.lt.s32.totalorder %s573, 39
    %s575 = scalar_select %p574, %s573, 39
    %s576 = scalar_lea.vmem [#allocation6], %s575
    %v577 = vld [vmem:[%s576] sm:$0x1]
    %578 = vst [vmem:[#allocation2 + $0x5] sm:$0x1] %v577
    %s579 = sadd.s32 %s68, 54
    %s580 = sld [smem:[#allocation5 + %s579]]
    %p581 = scmp.gt.s32.totalorder %s580, 0
    %s582 = scalar_select %p581, %s580, 0
    %p583 = scmp.lt.s32.totalorder %s582, 39
    %s584 = scalar_select %p583, %s582, 39
    %s585 = scalar_lea.vmem [#allocation6], %s584
    %v586 = vld [vmem:[%s585] sm:$0x1]
    %587 = vst [vmem:[#allocation2 + $0x6] sm:$0x1] %v586
    %s588 = sadd.s32 %s68, 62
    %s589 = sld [smem:[#allocation5 + %s588]]
    %p590 = scmp.gt.s32.totalorder %s589, 0
    %s591 = scalar_select %p590, %s589, 0
    %p592 = scmp.lt.s32.totalorder %s591, 39
    %s593 = scalar_select %p592, %s591, 39
    %s594 = scalar_lea.vmem [#allocation6], %s593
    %v595 = vld [vmem:[%s594] sm:$0x1]
    %596 = vst [vmem:[#allocation2 + $0x7] sm:$0x1] %v595
    %v597 = vld [vmem:[#allocation3] sm:$0xff]
    %v598 = vld [vmem:[#allocation2] sm:$0xff]
    %v599 = vadd.f32 %v597, %v598
    %600 = vst [vmem:[#allocation3] sm:$0xff] %v599
    %s601 = sadd.s32 %s68, 7
    %s602 = sld [smem:[#allocation5 + %s601]]
    %p603 = scmp.gt.s32.totalorder %s602, 0
    %s604 = scalar_select %p603, %s602, 0
    %p605 = scmp.lt.s32.totalorder %s604, 39
    %s606 = scalar_select %p605, %s604, 39
    %s607 = scalar_lea.vmem [#allocation6], %s606
    %v608 = vld [vmem:[%s607] sm:$0x1]
    %609 = vst [vmem:[#allocation2] sm:$0x1] %v608
    %s610 = sadd.s32 %s68, 15
    %s611 = sld [smem:[#allocation5 + %s610]]
    %p612 = scmp.gt.s32.totalorder %s611, 0
    %s613 = scalar_select %p612, %s611, 0
    %p614 = scmp.lt.s32.totalorder %s613, 39
    %s615 = scalar_select %p614, %s613, 39
    %s616 = scalar_lea.vmem [#allocation6], %s615
    %v617 = vld [vmem:[%s616] sm:$0x1]
    %618 = vst [vmem:[#allocation2 + $0x1] sm:$0x1] %v617
    %s619 = sadd.s32 %s68, 23
    %s620 = sld [smem:[#allocation5 + %s619]]
    %p621 = scmp.gt.s32.totalorder %s620, 0
    %s622 = scalar_select %p621, %s620, 0
    %p623 = scmp.lt.s32.totalorder %s622, 39
    %s624 = scalar_select %p623, %s622, 39
    %s625 = scalar_lea.vmem [#allocation6], %s624
    %v626 = vld [vmem:[%s625] sm:$0x1]
    %627 = vst [vmem:[#allocation2 + $0x2] sm:$0x1] %v626
    %s628 = sadd.s32 %s68, 31
    %s629 = sld [smem:[#allocation5 + %s628]]
    %p630 = scmp.gt.s32.totalorder %s629, 0
    %s631 = scalar_select %p630, %s629, 0
    %p632 = scmp.lt.s32.totalorder %s631, 39
    %s633 = scalar_select %p632, %s631, 39
    %s634 = scalar_lea.vmem [#allocation6], %s633
    %v635 = vld [vmem:[%s634] sm:$0x1]
    %636 = vst [vmem:[#allocation2 + $0x3] sm:$0x1] %v635
    %s637 = sadd.s32 %s68, 39
    %s638 = sld [smem:[#allocation5 + %s637]]
    %p639 = scmp.gt.s32.totalorder %s638, 0
    %s640 = scalar_select %p639, %s638, 0
    %p641 = scmp.lt.s32.totalorder %s640, 39
    %s642 = scalar_select %p641, %s640, 39
    %s643 = scalar_lea.vmem [#allocation6], %s642
    %v644 = vld [vmem:[%s643] sm:$0x1]
    %645 = vst [vmem:[#allocation2 + $0x4] sm:$0x1] %v644
    %s646 = sadd.s32 %s68, 47
    %s647 = sld [smem:[#allocation5 + %s646]]
    %p648 = scmp.gt.s32.totalorder %s647, 0
    %s649 = scalar_select %p648, %s647, 0
    %p650 = scmp.lt.s32.totalorder %s649, 39
    %s651 = scalar_select %p650, %s649, 39
    %s652 = scalar_lea.vmem [#allocation6], %s651
    %v653 = vld [vmem:[%s652] sm:$0x1]
    %654 = vst [vmem:[#allocation2 + $0x5] sm:$0x1] %v653
    %s655 = sadd.s32 %s68, 55
    %s656 = sld [smem:[#allocation5 + %s655]]
    %p657 = scmp.gt.s32.totalorder %s656, 0
    %s658 = scalar_select %p657, %s656, 0
    %p659 = scmp.lt.s32.totalorder %s658, 39
    %s660 = scalar_select %p659, %s658, 39
    %s661 = scalar_lea.vmem [#allocation6], %s660
    %v662 = vld [vmem:[%s661] sm:$0x1]
    %663 = vst [vmem:[#allocation2 + $0x6] sm:$0x1] %v662
    %s664 = sadd.s32 %s68, 63
    %s665 = sld [smem:[#allocation5 + %s664]]
    %p666 = scmp.gt.s32.totalorder %s665, 0
    %s667 = scalar_select %p666, %s665, 0
    %p668 = scmp.lt.s32.totalorder %s667, 39
    %s669 = scalar_select %p668, %s667, 39
    %s670 = scalar_lea.vmem [#allocation6], %s669
    %v671 = vld [vmem:[%s670] sm:$0x1]
    %672 = vst [vmem:[#allocation2 + $0x7] sm:$0x1] %v671
    %v673 = vld [vmem:[#allocation3] sm:$0xff]
    %v674 = vld [vmem:[#allocation2] sm:$0xff]
    %v675 = vadd.f32 %v673, %v674
    %676 = vst [vmem:[#allocation3] sm:$0xff] %v675
    %v677 = vld [vmem:[#allocation3] sm:$0xff]
    %v678 = vpack.c.bf16 %v677, %v677
    %v679 = vld [vmem:[#allocation9] sm:$0xf]
    %v680 = vld [vmem:[#allocation9 + $0x4] sm:$0xf]
    %v681 = vld [vmem:[#allocation9 + $0x8] sm:$0xf]
    %v682 = vld [vmem:[#allocation9 + $0xc] sm:$0xf]
    %v683 = vld [vmem:[#allocation9 + $0x10] sm:$0xf]
    %v684 = vld [vmem:[#allocation9 + $0x14] sm:$0xf]
    %v685 = vld [vmem:[#allocation9 + $0x18] sm:$0xf]
    %v686 = vld [vmem:[#allocation9 + $0x1c] sm:$0xf]
    %v687 = vld [vmem:[#allocation9 + $0x20] sm:$0xf]
    %v688 = vld [vmem:[#allocation9 + $0x24] sm:$0xf]
    %v689 = vld [vmem:[#allocation9 + $0x28] sm:$0xf]
    %v690 = vld [vmem:[#allocation9 + $0x2c] sm:$0xf]
    %v691 = vld [vmem:[#allocation9 + $0x30] sm:$0xf]
    %v692 = vld [vmem:[#allocation9 + $0x34] sm:$0xf]
    %v693 = vld [vmem:[#allocation9 + $0x38] sm:$0xf]
    %v694 = vld [vmem:[#allocation9 + $0x3c] sm:$0xf]
    %v695 = vld [vmem:[%s3] sm:$0x1]
    %v697 = vlaneseq
    %v698 = vshrl.u32 %v697, 7
    %v699 = vsub.s32 0, %v698
    %v700 = vrot.slane %v695, %v699
    %v718 = vunpack.c.l.b16 %v679
    %v719 = vunpack.c.l.b16 %v680
    %v720 = vunpack.c.l.b16 %v681
    %v721 = vunpack.c.l.b16 %v682
    %v722 = vunpack.c.l.b16 %v683
    %v723 = vunpack.c.l.b16 %v684
    %v724 = vunpack.c.l.b16 %v685
    %v725 = vunpack.c.l.b16 %v686
    %v726 = vunpack.c.l.b16 %v687
    %v727 = vunpack.c.l.b16 %v688
    %v728 = vunpack.c.l.b16 %v689
    %v729 = vunpack.c.l.b16 %v690
    %v730 = vunpack.c.l.b16 %v691
    %v731 = vunpack.c.l.b16 %v692
    %v732 = vunpack.c.l.b16 %v693
    %v733 = vunpack.c.l.b16 %v694
    %v734 = vpack.c.b16 %v719, %v718
    %v735 = vpack.c.b16 %v721, %v720
    %v736 = vpack.c.b16 %v723, %v722
    %v737 = vpack.c.b16 %v725, %v724
    %v738 = vpack.c.b16 %v727, %v726
    %v739 = vpack.c.b16 %v729, %v728
    %v740 = vpack.c.b16 %v731, %v730
    %v741 = vpack.c.b16 %v733, %v732
    %750 = vmatprep.subr.bf16.mxu0 0
    %751 = vmatpush1.bf16.msra.mxu0 %v734
    %752 = vmatprep.subr.bf16.mxu0 0
    %753 = vmatpush1.bf16.msra.mxu0 %v735
    %754 = vmatprep.subr.bf16.mxu0 0
    %755 = vmatpush1.bf16.msra.mxu0 %v736
    %756 = vmatprep.subr.bf16.mxu0 0
    %757 = vmatpush1.bf16.msra.mxu0 %v737
    %758 = vmatprep.subr.bf16.mxu0 0
    %759 = vmatpush1.bf16.msra.mxu0 %v738
    %760 = vmatprep.subr.bf16.mxu0 0
    %761 = vmatpush1.bf16.msra.mxu0 %v739
    %762 = vmatprep.subr.bf16.mxu0 0
    %763 = vmatpush1.bf16.msra.mxu0 %v740
    %764 = vmatprep.subr.bf16.mxu0 0
    %765 = vmatpush1.bf16.msra.mxu0 %v741
    %766 = vmatprep.subr.bf16.mxu0 0
    %767 = vmatpush1.bf16.msra.mxu0 0
    %768 = vmatprep.subr.bf16.mxu0 0
    %769 = vmatpush1.bf16.msra.mxu0 0
    %770 = vmatprep.subr.bf16.mxu0 0
    %771 = vmatpush1.bf16.msra.mxu0 0
    %772 = vmatprep.subr.bf16.mxu0 0
    %773 = vmatpush1.bf16.msra.mxu0 0
    %774 = vmatprep.subr.bf16.mxu0 0
    %775 = vmatpush1.bf16.msra.mxu0 0
    %776 = vmatprep.subr.bf16.mxu0 0
    %777 = vmatpush1.bf16.msra.mxu0 0
    %778 = vmatprep.subr.bf16.mxu0 0
    %779 = vmatpush1.bf16.msra.mxu0 0
    %780 = vmatprep.subr.bf16.mxu0 0
    %781 = vmatpush1.bf16.msra.mxu0 0
    %782 = vmatprep.mubr.bf16.mxu0 0
    %783 = vmatmul.mubr.bf16.gmra.mrb[0].mxu0 %v678
    %v784 = vpop.f32.mrb[0].mxu0
    %v785 = vadd.f32 %v700, %v784
    %v786 = vpop.f32.mrb[0].mxu0
    %v787 = vpop.f32.mrb[0].mxu0
    %v788 = vpop.f32.mrb[0].mxu0
    %789 = vdwg.mxu0
    %v790 = vmax.f32 %v785, 0.0
    %v791 = vpack.c.bf16 %v790, %v790
    %v792 = vld [vmem:[#allocation11] sm:$0xf]
    %v793 = vld [vmem:[#allocation11 + $0x4] sm:$0xf]
    %v794 = vld [vmem:[#allocation11 + $0x8] sm:$0xf]
    %v795 = vld [vmem:[#allocation11 + $0xc] sm:$0xf]
    %v796 = vld [vmem:[#allocation11 + $0x10] sm:$0xf]
    %v797 = vld [vmem:[#allocation11 + $0x14] sm:$0xf]
    %v798 = vld [vmem:[#allocation11 + $0x18] sm:$0xf]
    %v799 = vld [vmem:[#allocation11 + $0x1c] sm:$0xf]
    %v800 = vld [vmem:[#allocation11 + $0x20] sm:$0xf]
    %v801 = vld [vmem:[#allocation11 + $0x24] sm:$0xf]
    %v802 = vld [vmem:[#allocation11 + $0x28] sm:$0xf]
    %v803 = vld [vmem:[#allocation11 + $0x2c] sm:$0xf]
    %v804 = vld [vmem:[#allocation11 + $0x30] sm:$0xf]
    %v805 = vld [vmem:[#allocation11 + $0x34] sm:$0xf]
    %v806 = vld [vmem:[#allocation11 + $0x38] sm:$0xf]
    %v807 = vld [vmem:[#allocation11 + $0x3c] sm:$0xf]
    %v808 = vld [vmem:[%s5] sm:$0x1]
    %v810 = vlaneseq
    %v811 = vshrl.u32 %v810, 7
    %v812 = vsub.s32 0, %v811
    %v813 = vrot.slane %v808, %v812
    %v831 = vunpack.c.l.b16 %v792
    %v832 = vunpack.c.l.b16 %v793
    %v833 = vunpack.c.l.b16 %v794
    %v834 = vunpack.c.l.b16 %v795
    %v835 = vunpack.c.l.b16 %v796
    %v836 = vunpack.c.l.b16 %v797
    %v837 = vunpack.c.l.b16 %v798
    %v838 = vunpack.c.l.b16 %v799
    %v839 = vunpack.c.l.b16 %v800
    %v840 = vunpack.c.l.b16 %v801
    %v841 = vunpack.c.l.b16 %v802
    %v842 = vunpack.c.l.b16 %v803
    %v843 = vunpack.c.l.b16 %v804
    %v844 = vunpack.c.l.b16 %v805
    %v845 = vunpack.c.l.b16 %v806
    %v846 = vunpack.c.l.b16 %v807
    %v847 = vpack.c.b16 %v832, %v831
    %v848 = vpack.c.b16 %v834, %v833
    %v849 = vpack.c.b16 %v836, %v835
    %v850 = vpack.c.b16 %v838, %v837
    %v851 = vpack.c.b16 %v840, %v839
    %v852 = vpack.c.b16 %v842, %v841
    %v853 = vpack.c.b16 %v844, %v843
    %v854 = vpack.c.b16 %v846, %v845
    %863 = vmatprep.subr.bf16.mxu0 0
    %864 = vmatpush1.bf16.msra.mxu0 %v847
    %865 = vmatprep.subr.bf16.mxu0 0
    %866 = vmatpush1.bf16.msra.mxu0 %v848
    %867 = vmatprep.subr.bf16.mxu0 0
    %868 = vmatpush1.bf16.msra.mxu0 %v849
    %869 = vmatprep.subr.bf16.mxu0 0
    %870 = vmatpush1.bf16.msra.mxu0 %v850
    %871 = vmatprep.subr.bf16.mxu0 0
    %872 = vmatpush1.bf16.msra.mxu0 %v851
    %873 = vmatprep.subr.bf16.mxu0 0
    %874 = vmatpush1.bf16.msra.mxu0 %v852
    %875 = vmatprep.subr.bf16.mxu0 0
    %876 = vmatpush1.bf16.msra.mxu0 %v853
    %877 = vmatprep.subr.bf16.mxu0 0
    %878 = vmatpush1.bf16.msra.mxu0 %v854
    %879 = vmatprep.subr.bf16.mxu0 0
    %880 = vmatpush1.bf16.msra.mxu0 0
    %881 = vmatprep.subr.bf16.mxu0 0
    %882 = vmatpush1.bf16.msra.mxu0 0
    %883 = vmatprep.subr.bf16.mxu0 0
    %884 = vmatpush1.bf16.msra.mxu0 0
    %885 = vmatprep.subr.bf16.mxu0 0
    %886 = vmatpush1.bf16.msra.mxu0 0
    %887 = vmatprep.subr.bf16.mxu0 0
    %888 = vmatpush1.bf16.msra.mxu0 0
    %889 = vmatprep.subr.bf16.mxu0 0
    %890 = vmatpush1.bf16.msra.mxu0 0
    %891 = vmatprep.subr.bf16.mxu0 0
    %892 = vmatpush1.bf16.msra.mxu0 0
    %893 = vmatprep.subr.bf16.mxu0 0
    %894 = vmatpush1.bf16.msra.mxu0 0
    %895 = vmatprep.mubr.bf16.mxu0 0
    %896 = vmatmul.mubr.bf16.gmra.mrb[0].mxu0 %v791
    %v897 = vpop.f32.mrb[0].mxu0
    %v898 = vadd.f32 %v813, %v897
    %v899 = vpop.f32.mrb[0].mxu0
    %v900 = vpop.f32.mrb[0].mxu0
    %v901 = vpop.f32.mrb[0].mxu0
    %902 = vdwg.mxu0
    %903 = vst [vmem:[#allocation12] sm:$0xff] %v898
    // Predicated region
    $region34: #{tpu_custom_call.1} parent=1 // pred_check
      _
    $region35: #{tpu_custom_call.1} parent=1 // pred_check_branch
      %905 = sbr.rel (0) target = $region37
    $region36: #{tpu_custom_call.1} parent=1 // pred_region
      %s907 = ssub.s32 128, 128
      %908 = vsyncadd [#allocation8], %s907
      %s910 = sshll.u32 [#allocation12], 4
      %s911 = int_to_ptr.vmem [resolvable:$true] %s910
      %913 = dma.vmem_to_hbm [thread:$0]  %s911, 128, %s6, [#allocation8]
    $region37: #{tpu_custom_call.1} parent=1 // pred_fallthru
      _
    // Predicated region
    $region38: #{tpu_custom_call.1} parent=1 // pred_check
      _
    $region39: #{tpu_custom_call.1} parent=1 // pred_check_branch
      %915 = sbr.rel (0) target = $region41
    $region40: #{tpu_custom_call.1} parent=1 // pred_region
      %916 = dma.done [#allocation8], 128
    $region41: #{tpu_custom_call.1} parent=1 // pred_fallthru
      _
    %917 = vsyncpa [#allocation7], 1
    %918 = vsyncpa [#allocation10], 1
    %919 = vsyncpa [#allocation8], 1

</llo_original>
